<compile_context>
chip_gen: v5e
topology: v5e:2x2
jax: 0.10.0
libtpu: 0.0.40
codegen_flags: <defaults>
</compile_context>

<pallas_src>
import functools
import math

import jax
import jax.numpy as jnp
from jax.experimental import pallas as pl
from jax.experimental.pallas import tpu as pltpu


# --------------------------------------------------------------------------
# In-kernel helpers
# --------------------------------------------------------------------------

def _ln(y, g, b, eps):
    mean = jnp.mean(y, axis=-1, keepdims=True)
    var = jnp.mean((y - mean) ** 2, axis=-1, keepdims=True)
    return (y - mean) * jax.lax.rsqrt(var + eps) * g + b


def _gelu_tanh(x):
    # TODO(synk): HF BERT default is erf-GELU; tanh approximation used here
    # (erf has no guaranteed Mosaic lowering).
    c = math.sqrt(2.0 / math.pi)
    return 0.5 * x * (1.0 + jnp.tanh(c * (x + 0.044715 * x * x * x)))


# --------------------------------------------------------------------------
# Fused whole-network kernel (grid over layers)
# --------------------------------------------------------------------------

def _tinybert_fused_kernel(
    # inputs
    emb_ref, emb_g_ref, emb_b_ref,
    qkv_w_ref, qkv_b_ref, ao_w_ref, ao_b_ref, aln_g_ref, aln_b_ref,
    i_w_ref, i_b_ref, o_w_ref, o_b_ref, oln_g_ref, oln_b_ref,
    cls_w_ref, cls_b_ref, wemb_w_ref, wemb_b_ref, whid_w_ref, whid_b_ref,
    # outputs
    logits_ref, emb_proj_ref, hid_proj_ref, probs_ref,
    # scratch
    x_state,
    *, B, S, nH, Dh, eps):
  l = pl.program_id(0)
  M = B * S
  H = nH * Dh

  # ---- layer 0 prologue: embedding LayerNorm + W_emb projection ----
  @pl.when(l == 0)
  def _():
    emb = emb_ref[...].astype(jnp.float32)
    x0 = _ln(emb, emb_g_ref[...], emb_b_ref[...], eps)
    x_state[...] = x0
    emb_proj_ref[...] = (
        jnp.dot(x0, wemb_w_ref[...], preferred_element_type=jnp.float32)
        + wemb_b_ref[...]).astype(emb_proj_ref.dtype)

  x = x_state[...]                                            # (M, H) f32

  # ---- attention block: QKV matmul -> per-head attention with fused
  #      output-projection accumulation -> +residual -> LayerNorm ----
  qkv = jnp.dot(x, qkv_w_ref[...],
                preferred_element_type=jnp.float32) + qkv_b_ref[...]   # (M, 3H)
  wao = ao_w_ref[...]                                          # (H, H)
  scale = 1.0 / math.sqrt(Dh)

  acc = jnp.zeros((M, H), jnp.float32)
  probs_per_head = []
  for h in range(nH):                                          # static unroll
    q = qkv[:, h * Dh:(h + 1) * Dh].reshape(B, S, Dh) * scale
    k = qkv[:, H + h * Dh:H + (h + 1) * Dh].reshape(B, S, Dh)
    v = qkv[:, 2 * H + h * Dh:2 * H + (h + 1) * Dh].reshape(B, S, Dh)
    s = jnp.einsum('bqd,bkd->bqk', q, k,
                   preferred_element_type=jnp.float32)         # (B, S, S)
    s = s - jnp.max(s, axis=-1, keepdims=True)
    e = jnp.exp(s)
    p = e / jnp.sum(e, axis=-1, keepdims=True)                 # exact softmax
    probs_per_head.append(p)
    ctx = jnp.einsum('bqk,bkd->bqd', p, v,
                     preferred_element_type=jnp.float32)       # (B, S, Dh)
    # fold output projection per head (sublane slice of wao; no ctx scratch)
    acc = acc + jnp.dot(ctx.reshape(M, Dh), wao[h * Dh:(h + 1) * Dh, :],
                        preferred_element_type=jnp.float32)

  # single store of all attention probabilities for this layer
  probs_ref[...] = jnp.stack(probs_per_head, axis=1).astype(probs_ref.dtype)

  x = _ln(acc + ao_b_ref[...] + x, aln_g_ref[...], aln_b_ref[...], eps)

  # ---- FFN block: intermediate -> GELU -> output -> +residual -> LN ----
  inter = _gelu_tanh(
      jnp.dot(x, i_w_ref[...], preferred_element_type=jnp.float32) + i_b_ref[...])
  y = jnp.dot(inter, o_w_ref[...], preferred_element_type=jnp.float32) + o_b_ref[...]
  x = _ln(y + x, oln_g_ref[...], oln_b_ref[...], eps)
  x_state[...] = x

  # ---- per-layer TinyBert hidden projection (lane-dense fit_size output) ----
  hid_proj_ref[...] = (
      jnp.dot(x, whid_w_ref[...], preferred_element_type=jnp.float32)
      + whid_b_ref[...]).astype(hid_proj_ref.dtype)

  # ---- classifier on the last layer ----
  @pl.when(l == pl.num_programs(0) - 1)
  def _():
    logits_ref[...] = (
        jnp.dot(x, cls_w_ref[...], preferred_element_type=jnp.float32)
        + cls_b_ref[...]).astype(logits_ref.dtype)


# --------------------------------------------------------------------------
# Wrapper
# --------------------------------------------------------------------------

def tinybert_forward(params, input_ids, *, num_heads):
  B, S = input_ids.shape
  H = params["word_emb"].shape[1]
  L = params["qkv_w"].shape[0]
  inter = params["i_w"].shape[2]
  fit = params["W_emb_w"].shape[1]
  num_labels = params["cls_w"].shape[1]
  nH = num_heads
  Dh = H // nH
  M = B * S
  dtype = params["word_emb"].dtype

  # TODO(synk): embedding row gather has no clean Pallas equivalent; done in JAX.
  we = params["word_emb"][input_ids]                   # (B, S, H)
  pe = params["pos_emb"][:S][None, :, :]               # (1, S, H)
  te = params["type_emb"][0][None, None, :]            # (1, 1, H)
  emb = (we + pe + te).reshape(M, H)                   # pre-LN embedding sum

  def _const_spec(shape):
    nd = len(shape)
    return pl.BlockSpec(shape, lambda l: (0,) * nd)

  def _layer_spec(shape):
    nd = len(shape)
    return pl.BlockSpec((None,) + shape, lambda l: (l,) + (0,) * nd)

  in_specs = [
      _const_spec((M, H)),                 # emb
      _const_spec((1, H)), _const_spec((1, H)),          # emb LN
      _layer_spec((H, 3 * H)), _layer_spec((1, 3 * H)),   # qkv
      _layer_spec((H, H)), _layer_spec((1, H)),           # attn out proj
      _layer_spec((1, H)), _layer_spec((1, H)),           # attn LN
      _layer_spec((H, inter)), _layer_spec((1, inter)),   # intermediate
      _layer_spec((inter, H)), _layer_spec((1, H)),       # ffn out
      _layer_spec((1, H)), _layer_spec((1, H)),           # out LN
      _const_spec((H, num_labels)), _const_spec((1, num_labels)),   # classifier
      _const_spec((H, fit)), _const_spec((1, fit)),       # W_emb
      _const_spec((H, fit)), _const_spec((1, fit)),       # W_hidden
  ]
  out_specs = (
      _const_spec((M, num_labels)),                                  # logits
      _const_spec((M, fit)),                                         # emb proj
      pl.BlockSpec((None, M, fit), lambda l: (l, 0, 0)),             # hid proj
      pl.BlockSpec((None, B, nH, S, S), lambda l: (l, 0, 0, 0, 0)),  # attn probs
  )
  out_shape = (
      jax.ShapeDtypeStruct((M, num_labels), dtype),
      jax.ShapeDtypeStruct((M, fit), dtype),
      jax.ShapeDtypeStruct((L, M, fit), dtype),
      jax.ShapeDtypeStruct((L, B, nH, S, S), jnp.float32),
  )

  kern = functools.partial(_tinybert_fused_kernel,
                           B=B, S=S, nH=nH, Dh=Dh, eps=1e-12)

  logits, emb_proj, hid_proj, probs = pl.pallas_call(
      kern,
      out_shape=out_shape,
      grid_spec=pltpu.PrefetchScalarGridSpec(
          num_scalar_prefetch=0,
          grid=(L,),
          in_specs=in_specs,
          out_specs=out_specs,
          scratch_shapes=[pltpu.VMEM((M, H), jnp.float32)],   # resident hidden state
      ),
      compiler_params=pltpu.CompilerParams(
          dimension_semantics=("arbitrary",)),
  )(emb, params["emb_ln_g"], params["emb_ln_b"],
    params["qkv_w"], params["qkv_b"], params["ao_w"], params["ao_b"],
    params["attn_ln_g"], params["attn_ln_b"],
    params["i_w"], params["i_b"], params["o_w"], params["o_b"],
    params["out_ln_g"], params["out_ln_b"],
    params["cls_w"], params["cls_b"],
    params["W_emb_w"], params["W_emb_b"],
    params["W_hidden_w"], params["W_hidden_b"])

  logits = logits.reshape(B, S, num_labels)
  hidden_out = (emb_proj.reshape(B, S, fit),) + tuple(
      hid_proj[i].reshape(B, S, fit) for i in range(L))
  attentions = tuple(probs[i] for i in range(L))
  return logits, hidden_out, attentions


# --------------------------------------------------------------------------
# Parameters
# --------------------------------------------------------------------------

def init_params(key, *, vocab, max_pos, H, nH, I, L, num_labels, fit_size,
                dtype=jnp.float32):
  del nH  # heads are a forward-time static argument (kept out of the pytree)
  keys = iter(jax.random.split(key, 16))

  def w(shape):
    return (0.02 * jax.random.normal(next(keys), shape)).astype(dtype)

  return {
      "word_emb": w((vocab, H)),
      "pos_emb": w((max_pos, H)),
      "type_emb": w((2, H)),
      "emb_ln_g": jnp.ones((1, H), dtype),
      "emb_ln_b": jnp.zeros((1, H), dtype),
      # per-layer weights stacked along a leading L axis (streamed by the grid);
      # dense weights stored pre-transposed (in, out) so kernels compute x @ w.
      "qkv_w": w((L, H, 3 * H)),
      "qkv_b": jnp.zeros((L, 1, 3 * H), dtype),
      "ao_w": w((L, H, H)),
      "ao_b": jnp.zeros((L, 1, H), dtype),
      "attn_ln_g": jnp.ones((L, 1, H), dtype),
      "attn_ln_b": jnp.zeros((L, 1, H), dtype),
      "i_w": w((L, H, I)),
      "i_b": jnp.zeros((L, 1, I), dtype),
      "o_w": w((L, I, H)),
      "o_b": jnp.zeros((L, 1, H), dtype),
      "out_ln_g": jnp.ones((L, 1, H), dtype),
      "out_ln_b": jnp.zeros((L, 1, H), dtype),
      "cls_w": w((H, num_labels)),
      "cls_b": jnp.zeros((1, num_labels), dtype),
      "W_emb_w": w((H, fit_size)),
      "W_emb_b": jnp.zeros((1, fit_size), dtype),
      "W_hidden_w": w((H, fit_size)),
      "W_hidden_b": jnp.zeros((1, fit_size), dtype),
  }


# --------------------------------------------------------------------------
# Pure-JAX reference (same math; used as a correctness smoke check)
# --------------------------------------------------------------------------

def _reference_forward(p, input_ids, *, num_heads):
  hp = jax.lax.Precision.HIGHEST
  B, S = input_ids.shape
  H = p["word_emb"].shape[1]
  nH = num_heads
  Dh = H // nH
  L = p["qkv_w"].shape[0]
  fit = p["W_emb_w"].shape[1]

  x = (p["word_emb"][input_ids] + p["pos_emb"][:S][None]
       + p["type_emb"][0][None, None]).reshape(B * S, H)
  x = _ln(x, p["emb_ln_g"], p["emb_ln_b"], 1e-12)
  hidden = [x]
  attns = []
  for l in range(L):
    qkv = jnp.dot(x, p["qkv_w"][l], precision=hp) + p["qkv_b"][l]
    q, k, v = jnp.split(qkv, 3, axis=-1)
    q = q.reshape(B, S, nH, Dh).transpose(0, 2, 1, 3)
    k = k.reshape(B, S, nH, Dh).transpose(0, 2, 1, 3)
    v = v.reshape(B, S, nH, Dh).transpose(0, 2, 1, 3)
    s = jnp.einsum('bhqd,bhkd->bhqk', q, k, precision=hp) / math.sqrt(Dh)
    pr = jax.nn.softmax(s, axis=-1)
    attns.append(pr)
    ctx = jnp.einsum('bhqk,bhkd->bhqd', pr, v, precision=hp)
    ctx = ctx.transpose(0, 2, 1, 3).reshape(B * S, H)
    ao = jnp.dot(ctx, p["ao_w"][l], precision=hp) + p["ao_b"][l]
    x = _ln(ao + x, p["attn_ln_g"][l], p["attn_ln_b"][l], 1e-12)
    inter = _gelu_tanh(jnp.dot(x, p["i_w"][l], precision=hp) + p["i_b"][l])
    y = jnp.dot(inter, p["o_w"][l], precision=hp) + p["o_b"][l]
    x = _ln(y + x, p["out_ln_g"][l], p["out_ln_b"][l], 1e-12)
    hidden.append(x)
  logits = (jnp.dot(x, p["cls_w"], precision=hp) + p["cls_b"]).reshape(B, S, -1)
  h0 = (jnp.dot(hidden[0], p["W_emb_w"], precision=hp)
        + p["W_emb_b"]).reshape(B, S, fit)
  hrest = tuple(
      (jnp.dot(h, p["W_hidden_w"], precision=hp)
       + p["W_hidden_b"]).reshape(B, S, fit) for h in hidden[1:])
  return logits, (h0,) + hrest, tuple(attns)


# --------------------------------------------------------------------------

if __name__ == "__main__":
  key = jax.random.PRNGKey(0)
  pkey, dkey = jax.random.split(key)

  B, S = 2, 8
  cfg = dict(vocab=100, max_pos=16, H=32, nH=2, I=64, L=2,
             num_labels=3, fit_size=768)

  params = init_params(pkey, **cfg)
  input_ids = jax.random.randint(dkey, (B, S), 0, cfg["vocab"], dtype=jnp.int32)

  fwd = jax.jit(functools.partial(tinybert_forward, num_heads=cfg["nH"]))
  logits, hidden, attns = fwd(params, input_ids)
  jax.block_until_ready((logits, hidden, attns))

  # shape / sanity checks
  assert logits.shape == (B, S, cfg["num_labels"])
  assert len(hidden) == cfg["L"] + 1
  assert all(h.shape == (B, S, cfg["fit_size"]) for h in hidden)
  assert len(attns) == cfg["L"]
  assert all(a.shape == (B, cfg["nH"], S, S) for a in attns)
  assert all(bool(jnp.all(jnp.isfinite(t))) for t in (logits, *hidden, *attns))

  # correctness smoke check against a pure-JAX reference of the same math
  r_logits, r_hidden, r_attns = _reference_forward(
      params, input_ids, num_heads=cfg["nH"])

  def _close(a, b):
    return bool(jnp.allclose(a, b, atol=1e-2, rtol=1e-2))

  assert _close(logits, r_logits)
  assert all(_close(a, b) for a, b in zip(hidden, r_hidden))
  assert all(_close(a, b) for a, b in zip(attns, r_attns))

  print("KERNEL_OK")
</pallas_src>

<mosaic_0001>
module attributes {stable_mosaic.version = 11 : i64} {
  func.func @_tinybert_fused_kernel(%arg0: i32, %arg1: memref<16x32xf32, #tpu.memory_space<vmem>>, %arg2: memref<1x32xf32, #tpu.memory_space<vmem>>, %arg3: memref<1x32xf32, #tpu.memory_space<vmem>>, %arg4: memref<1x32x96xf32, #tpu.memory_space<vmem>>, %arg5: memref<1x1x96xf32, #tpu.memory_space<vmem>>, %arg6: memref<1x32x32xf32, #tpu.memory_space<vmem>>, %arg7: memref<1x1x32xf32, #tpu.memory_space<vmem>>, %arg8: memref<1x1x32xf32, #tpu.memory_space<vmem>>, %arg9: memref<1x1x32xf32, #tpu.memory_space<vmem>>, %arg10: memref<1x32x64xf32, #tpu.memory_space<vmem>>, %arg11: memref<1x1x64xf32, #tpu.memory_space<vmem>>, %arg12: memref<1x64x32xf32, #tpu.memory_space<vmem>>, %arg13: memref<1x1x32xf32, #tpu.memory_space<vmem>>, %arg14: memref<1x1x32xf32, #tpu.memory_space<vmem>>, %arg15: memref<1x1x32xf32, #tpu.memory_space<vmem>>, %arg16: memref<32x3xf32, #tpu.memory_space<vmem>>, %arg17: memref<1x3xf32, #tpu.memory_space<vmem>>, %arg18: memref<32x768xf32, #tpu.memory_space<vmem>>, %arg19: memref<1x768xf32, #tpu.memory_space<vmem>>, %arg20: memref<32x768xf32, #tpu.memory_space<vmem>>, %arg21: memref<1x768xf32, #tpu.memory_space<vmem>>, %arg22: memref<16x3xf32, #tpu.memory_space<vmem>>, %arg23: memref<16x768xf32, #tpu.memory_space<vmem>>, %arg24: memref<1x16x768xf32, #tpu.memory_space<vmem>>, %arg25: memref<1x2x2x8x8xf32, #tpu.memory_space<vmem>>, %arg26: memref<16x32xf32, #tpu.memory_space<vmem>>) attributes {dimension_semantics = [#tpu.dimension_semantics<arbitrary>], iteration_bounds = array<i64: 2>, scalar_prefetch = 0 : i64, scratch_operands = 1 : i64, tpu.core_type = #tpu.core_type<tc>, window_params = [{pipeline_mode = #tpu.pipeline_mode<synchronous>, transform_indices = @transform_0, window_bounds = array<i64: 16, 32>}, {pipeline_mode = #tpu.pipeline_mode<synchronous>, transform_indices = @transform_1, window_bounds = array<i64: 1, 32>}, {pipeline_mode = #tpu.pipeline_mode<synchronous>, transform_indices = @transform_2, window_bounds = array<i64: 1, 32>}, {transform_indices = @transform_3, window_bounds = array<i64: 1, 32, 96>}, {transform_indices = @transform_4, window_bounds = array<i64: 1, 1, 96>}, {transform_indices = @transform_5, window_bounds = array<i64: 1, 32, 32>}, {transform_indices = @transform_6, window_bounds = array<i64: 1, 1, 32>}, {transform_indices = @transform_7, window_bounds = array<i64: 1, 1, 32>}, {transform_indices = @transform_8, window_bounds = array<i64: 1, 1, 32>}, {transform_indices = @transform_9, window_bounds = array<i64: 1, 32, 64>}, {transform_indices = @transform_10, window_bounds = array<i64: 1, 1, 64>}, {transform_indices = @transform_11, window_bounds = array<i64: 1, 64, 32>}, {transform_indices = @transform_12, window_bounds = array<i64: 1, 1, 32>}, {transform_indices = @transform_13, window_bounds = array<i64: 1, 1, 32>}, {transform_indices = @transform_14, window_bounds = array<i64: 1, 1, 32>}, {pipeline_mode = #tpu.pipeline_mode<synchronous>, transform_indices = @transform_15, window_bounds = array<i64: 32, 3>}, {pipeline_mode = #tpu.pipeline_mode<synchronous>, transform_indices = @transform_16, window_bounds = array<i64: 1, 3>}, {pipeline_mode = #tpu.pipeline_mode<synchronous>, transform_indices = @transform_17, window_bounds = array<i64: 32, 768>}, {pipeline_mode = #tpu.pipeline_mode<synchronous>, transform_indices = @transform_18, window_bounds = array<i64: 1, 768>}, {pipeline_mode = #tpu.pipeline_mode<synchronous>, transform_indices = @transform_19, window_bounds = array<i64: 32, 768>}, {pipeline_mode = #tpu.pipeline_mode<synchronous>, transform_indices = @transform_20, window_bounds = array<i64: 1, 768>}, {pipeline_mode = #tpu.pipeline_mode<synchronous>, transform_indices = @transform_21, window_bounds = array<i64: 16, 3>}, {pipeline_mode = #tpu.pipeline_mode<synchronous>, transform_indices = @transform_22, window_bounds = array<i64: 16, 768>}, {transform_indices = @transform_23, window_bounds = array<i64: 1, 16, 768>}, {transform_indices = @transform_24, window_bounds = array<i64: 1, 2, 2, 8, 8>}]} {
    %c0_i32 = arith.constant 0 : i32
    %0 = arith.cmpi eq, %arg0, %c0_i32 : i32
    %1 = arith.extui %0 : i1 to i32
    %c0_i32_0 = arith.constant 0 : i32
    %2 = arith.cmpi ne, %1, %c0_i32_0 : i32
    scf.if %2 {
      %c0_83 = arith.constant 0 : index
      %c0_84 = arith.constant 0 : index
      %163 = vector.load %arg1[%c0_83, %c0_84] : memref<16x32xf32, #tpu.memory_space<vmem>>, vector<16x32xf32>
      %c0_85 = arith.constant 0 : index
      %c0_86 = arith.constant 0 : index
      %164 = vector.load %arg2[%c0_85, %c0_86] : memref<1x32xf32, #tpu.memory_space<vmem>>, vector<1x32xf32>
      %c0_87 = arith.constant 0 : index
      %c0_88 = arith.constant 0 : index
      %165 = vector.load %arg3[%c0_87, %c0_88] : memref<1x32xf32, #tpu.memory_space<vmem>>, vector<1x32xf32>
      %cst_89 = arith.constant dense<0.000000e+00> : vector<16xf32>
      %166 = vector.multi_reduction <add>, %163, %cst_89 [1] : vector<16x32xf32> to vector<16xf32>
      %167 = vector.shape_cast %166 : vector<16xf32> to vector<16x1xf32>
      %cst_90 = arith.constant 3.200000e+01 : f32
      %168 = vector.broadcast %cst_90 : f32 to vector<16x1xf32>
      %169 = arith.divf %167, %168 : vector<16x1xf32>
      %170 = vector.broadcast %169 : vector<16x1xf32> to vector<16x32xf32>
      %171 = arith.subf %163, %170 : vector<16x32xf32>
      %172 = arith.mulf %171, %171 : vector<16x32xf32>
      %cst_91 = arith.constant dense<0.000000e+00> : vector<16xf32>
      %173 = vector.multi_reduction <add>, %172, %cst_91 [1] : vector<16x32xf32> to vector<16xf32>
      %174 = vector.shape_cast %173 : vector<16xf32> to vector<16x1xf32>
      %cst_92 = arith.constant 3.200000e+01 : f32
      %175 = vector.broadcast %cst_92 : f32 to vector<16x1xf32>
      %176 = arith.divf %174, %175 : vector<16x1xf32>
      %177 = vector.broadcast %169 : vector<16x1xf32> to vector<16x32xf32>
      %178 = arith.subf %163, %177 : vector<16x32xf32>
      %cst_93 = arith.constant 9.99999996E-13 : f32
      %179 = vector.broadcast %cst_93 : f32 to vector<16x1xf32>
      %180 = arith.addf %176, %179 : vector<16x1xf32>
      %181 = math.rsqrt %180 : vector<16x1xf32>
      %182 = vector.broadcast %181 : vector<16x1xf32> to vector<16x32xf32>
      %183 = arith.mulf %178, %182 : vector<16x32xf32>
      %184 = vector.broadcast %164 : vector<1x32xf32> to vector<16x32xf32>
      %185 = arith.mulf %183, %184 : vector<16x32xf32>
      %186 = vector.broadcast %165 : vector<1x32xf32> to vector<16x32xf32>
      %187 = arith.addf %185, %186 : vector<16x32xf32>
      %c0_94 = arith.constant 0 : index
      %c0_95 = arith.constant 0 : index
      %188 = vector.load %arg26[%c0_94, %c0_95] : memref<16x32xf32, #tpu.memory_space<vmem>>, vector<16x32xf32>
      tpu.vector_store %arg26[%c0_94, %c0_95], %187 {strides = array<i32>} : memref<16x32xf32, #tpu.memory_space<vmem>>, vector<16x32xf32>,
      %c0_96 = arith.constant 0 : index
      %c0_97 = arith.constant 0 : index
      %189 = vector.load %arg18[%c0_96, %c0_97] : memref<32x768xf32, #tpu.memory_space<vmem>>, vector<32x768xf32>
      %cst_98 = arith.constant dense<0.000000e+00> : vector<16x768xf32>
      %190 = tpu.matmul %187, %189, %cst_98 {dimension_numbers = #tpu.dot_dimension_numbers<[1], [0], [0], [1], [0, 0, 1, 1], [], []>} : vector<16x32xf32>, vector<32x768xf32>, vector<16x768xf32> -> vector<16x768xf32>
      %c0_99 = arith.constant 0 : index
      %c0_100 = arith.constant 0 : index
      %191 = vector.load %arg19[%c0_99, %c0_100] : memref<1x768xf32, #tpu.memory_space<vmem>>, vector<1x768xf32>
      %192 = vector.broadcast %191 : vector<1x768xf32> to vector<16x768xf32>
      %193 = arith.addf %190, %192 : vector<16x768xf32>
      %c0_101 = arith.constant 0 : index
      %c0_102 = arith.constant 0 : index
      %194 = vector.load %arg23[%c0_101, %c0_102] : memref<16x768xf32, #tpu.memory_space<vmem>>, vector<16x768xf32>
      tpu.vector_store %arg23[%c0_101, %c0_102], %193 {strides = array<i32>} : memref<16x768xf32, #tpu.memory_space<vmem>>, vector<16x768xf32>,
    } else {
    }
    %c0 = arith.constant 0 : index
    %c0_1 = arith.constant 0 : index
    %3 = vector.load %arg26[%c0, %c0_1] : memref<16x32xf32, #tpu.memory_space<vmem>>, vector<16x32xf32>
    %c0_2 = arith.constant 0 : index
    %c0_3 = arith.constant 0 : index
    %c0_4 = arith.constant 0 : index
    %4 = vector.load %arg4[%c0_2, %c0_3, %c0_4] : memref<1x32x96xf32, #tpu.memory_space<vmem>>, vector<1x32x96xf32>
    %5 = vector.shape_cast %4 : vector<1x32x96xf32> to vector<32x96xf32>
    %cst = arith.constant dense<0.000000e+00> : vector<16x96xf32>
    %6 = tpu.matmul %3, %5, %cst {dimension_numbers = #tpu.dot_dimension_numbers<[1], [0], [0], [1], [0, 0, 1, 1], [], []>} : vector<16x32xf32>, vector<32x96xf32>, vector<16x96xf32> -> vector<16x96xf32>
    %c0_5 = arith.constant 0 : index
    %c0_6 = arith.constant 0 : index
    %c0_7 = arith.constant 0 : index
    %7 = vector.load %arg5[%c0_5, %c0_6, %c0_7] : memref<1x1x96xf32, #tpu.memory_space<vmem>>, vector<1x1x96xf32>
    %8 = vector.shape_cast %7 : vector<1x1x96xf32> to vector<1x96xf32>
    %9 = vector.broadcast %8 : vector<1x96xf32> to vector<16x96xf32>
    %10 = arith.addf %6, %9 : vector<16x96xf32>
    %c0_8 = arith.constant 0 : index
    %c0_9 = arith.constant 0 : index
    %c0_10 = arith.constant 0 : index
    %11 = vector.load %arg6[%c0_8, %c0_9, %c0_10] : memref<1x32x32xf32, #tpu.memory_space<vmem>>, vector<1x32x32xf32>
    %12 = vector.shape_cast %11 : vector<1x32x32xf32> to vector<32x32xf32>
    %cst_11 = arith.constant 0.000000e+00 : f32
    %13 = vector.broadcast %cst_11 : f32 to vector<16x32xf32>
    %14 = vector.extract_strided_slice %10 {offsets = [0, 0], sizes = [16, 16], strides = [1, 1]} : vector<16x96xf32> to vector<16x16xf32>
    %15 = vector.shape_cast %14 : vector<16x16xf32> to vector<2x8x16xf32>
    %cst_12 = arith.constant 2.500000e-01 : f32
    %16 = vector.broadcast %cst_12 : f32 to vector<2x8x16xf32>
    %17 = arith.mulf %15, %16 : vector<2x8x16xf32>
    %18 = vector.extract_strided_slice %10 {offsets = [0, 32], sizes = [16, 16], strides = [1, 1]} : vector<16x96xf32> to vector<16x16xf32>
    %19 = vector.shape_cast %18 : vector<16x16xf32> to vector<2x8x16xf32>
    %20 = vector.extract_strided_slice %10 {offsets = [0, 64], sizes = [16, 16], strides = [1, 1]} : vector<16x96xf32> to vector<16x16xf32>
    %21 = vector.shape_cast %20 : vector<16x16xf32> to vector<2x8x16xf32>
    "tpu.trace_start"() <{level = 10 : i32, message = "bqd,bkd->bqk"}> : () -> ()
    %cst_13 = arith.constant dense<0.000000e+00> : vector<2x8x8xf32>
    %22 = tpu.matmul %17, %19, %cst_13 {dimension_numbers = #tpu.dot_dimension_numbers<[2], [2], [1], [1], [0, 0, 0, 1, 1, 1], [0], [0]>} : vector<2x8x16xf32>, vector<2x8x16xf32>, vector<2x8x8xf32> -> vector<2x8x8xf32>
    "tpu.trace_stop"() : () -> ()
    %cst_14 = arith.constant dense<0xFF800000> : vector<2x8xf32>
    %23 = vector.multi_reduction <maximumf>, %22, %cst_14 [2] : vector<2x8x8xf32> to vector<2x8xf32>
    %24 = vector.shape_cast %23 : vector<2x8xf32> to vector<2x8x1xf32>
    %25 = vector.broadcast %24 : vector<2x8x1xf32> to vector<2x8x8xf32>
    %26 = arith.subf %22, %25 : vector<2x8x8xf32>
    %27 = math.exp %26 : vector<2x8x8xf32>
    %cst_15 = arith.constant dense<0.000000e+00> : vector<2x8xf32>
    %28 = vector.multi_reduction <add>, %27, %cst_15 [2] : vector<2x8x8xf32> to vector<2x8xf32>
    %29 = vector.shape_cast %28 : vector<2x8xf32> to vector<2x8x1xf32>
    %30 = vector.broadcast %29 : vector<2x8x1xf32> to vector<2x8x8xf32>
    %31 = arith.divf %27, %30 : vector<2x8x8xf32>
    "tpu.trace_start"() <{level = 10 : i32, message = "bqk,bkd->bqd"}> : () -> ()
    %cst_16 = arith.constant dense<0.000000e+00> : vector<2x8x16xf32>
    %32 = tpu.matmul %31, %21, %cst_16 {dimension_numbers = #tpu.dot_dimension_numbers<[2], [1], [1], [2], [0, 0, 0, 1, 1, 2], [0], [0]>} : vector<2x8x8xf32>, vector<2x8x16xf32>, vector<2x8x16xf32> -> vector<2x8x16xf32>
    "tpu.trace_stop"() : () -> ()
    %33 = vector.shape_cast %32 : vector<2x8x16xf32> to vector<16x16xf32>
    %34 = vector.extract_strided_slice %12 {offsets = [0, 0], sizes = [16, 32], strides = [1, 1]} : vector<32x32xf32> to vector<16x32xf32>
    %cst_17 = arith.constant dense<0.000000e+00> : vector<16x32xf32>
    %35 = tpu.matmul %33, %34, %cst_17 {dimension_numbers = #tpu.dot_dimension_numbers<[1], [0], [0], [1], [0, 0, 1, 1], [], []>} : vector<16x16xf32>, vector<16x32xf32>, vector<16x32xf32> -> vector<16x32xf32>
    %36 = arith.addf %13, %35 : vector<16x32xf32>
    %37 = vector.extract_strided_slice %10 {offsets = [0, 16], sizes = [16, 16], strides = [1, 1]} : vector<16x96xf32> to vector<16x16xf32>
    %38 = vector.shape_cast %37 : vector<16x16xf32> to vector<2x8x16xf32>
    %cst_18 = arith.constant 2.500000e-01 : f32
    %39 = vector.broadcast %cst_18 : f32 to vector<2x8x16xf32>
    %40 = arith.mulf %38, %39 : vector<2x8x16xf32>
    %41 = vector.extract_strided_slice %10 {offsets = [0, 48], sizes = [16, 16], strides = [1, 1]} : vector<16x96xf32> to vector<16x16xf32>
    %42 = vector.shape_cast %41 : vector<16x16xf32> to vector<2x8x16xf32>
    %43 = vector.extract_strided_slice %10 {offsets = [0, 80], sizes = [16, 16], strides = [1, 1]} : vector<16x96xf32> to vector<16x16xf32>
    %44 = vector.shape_cast %43 : vector<16x16xf32> to vector<2x8x16xf32>
    "tpu.trace_start"() <{level = 10 : i32, message = "bqd,bkd->bqk"}> : () -> ()
    %cst_19 = arith.constant dense<0.000000e+00> : vector<2x8x8xf32>
    %45 = tpu.matmul %40, %42, %cst_19 {dimension_numbers = #tpu.dot_dimension_numbers<[2], [2], [1], [1], [0, 0, 0, 1, 1, 1], [0], [0]>} : vector<2x8x16xf32>, vector<2x8x16xf32>, vector<2x8x8xf32> -> vector<2x8x8xf32>
    "tpu.trace_stop"() : () -> ()
    %cst_20 = arith.constant dense<0xFF800000> : vector<2x8xf32>
    %46 = vector.multi_reduction <maximumf>, %45, %cst_20 [2] : vector<2x8x8xf32> to vector<2x8xf32>
    %47 = vector.shape_cast %46 : vector<2x8xf32> to vector<2x8x1xf32>
    %48 = vector.broadcast %47 : vector<2x8x1xf32> to vector<2x8x8xf32>
    %49 = arith.subf %45, %48 : vector<2x8x8xf32>
    %50 = math.exp %49 : vector<2x8x8xf32>
    %cst_21 = arith.constant dense<0.000000e+00> : vector<2x8xf32>
    %51 = vector.multi_reduction <add>, %50, %cst_21 [2] : vector<2x8x8xf32> to vector<2x8xf32>
    %52 = vector.shape_cast %51 : vector<2x8xf32> to vector<2x8x1xf32>
    %53 = vector.broadcast %52 : vector<2x8x1xf32> to vector<2x8x8xf32>
    %54 = arith.divf %50, %53 : vector<2x8x8xf32>
    "tpu.trace_start"() <{level = 10 : i32, message = "bqk,bkd->bqd"}> : () -> ()
    %cst_22 = arith.constant dense<0.000000e+00> : vector<2x8x16xf32>
    %55 = tpu.matmul %54, %44, %cst_22 {dimension_numbers = #tpu.dot_dimension_numbers<[2], [1], [1], [2], [0, 0, 0, 1, 1, 2], [0], [0]>} : vector<2x8x8xf32>, vector<2x8x16xf32>, vector<2x8x16xf32> -> vector<2x8x16xf32>
    "tpu.trace_stop"() : () -> ()
    %56 = vector.shape_cast %55 : vector<2x8x16xf32> to vector<16x16xf32>
    %57 = vector.extract_strided_slice %12 {offsets = [16, 0], sizes = [16, 32], strides = [1, 1]} : vector<32x32xf32> to vector<16x32xf32>
    %cst_23 = arith.constant dense<0.000000e+00> : vector<16x32xf32>
    %58 = tpu.matmul %56, %57, %cst_23 {dimension_numbers = #tpu.dot_dimension_numbers<[1], [0], [0], [1], [0, 0, 1, 1], [], []>} : vector<16x16xf32>, vector<16x32xf32>, vector<16x32xf32> -> vector<16x32xf32>
    %59 = arith.addf %36, %58 : vector<16x32xf32>
    %60 = vector.shape_cast %31 : vector<2x8x8xf32> to vector<2x1x8x8xf32>
    %61 = vector.shape_cast %54 : vector<2x8x8xf32> to vector<2x1x8x8xf32>
    %62 = tpu.concatenate %60, %61 in 1 : vector<2x1x8x8xf32>, vector<2x1x8x8xf32> -> vector<2x2x8x8xf32>
    %c0_24 = arith.constant 0 : index
    %c0_25 = arith.constant 0 : index
    %c0_26 = arith.constant 0 : index
    %c0_27 = arith.constant 0 : index
    %c0_28 = arith.constant 0 : index
    %63 = vector.load %arg25[%c0_24, %c0_25, %c0_26, %c0_27, %c0_28] : memref<1x2x2x8x8xf32, #tpu.memory_space<vmem>>, vector<1x2x2x8x8xf32>
    %64 = vector.shape_cast %63 : vector<1x2x2x8x8xf32> to vector<2x2x8x8xf32>
    %65 = vector.shape_cast %62 : vector<2x2x8x8xf32> to vector<1x2x2x8x8xf32>
    tpu.vector_store %arg25[%c0_24, %c0_25, %c0_26, %c0_27, %c0_28], %65 {strides = array<i32>} : memref<1x2x2x8x8xf32, #tpu.memory_space<vmem>>, vector<1x2x2x8x8xf32>,
    %c0_29 = arith.constant 0 : index
    %c0_30 = arith.constant 0 : index
    %c0_31 = arith.constant 0 : index
    %66 = vector.load %arg7[%c0_29, %c0_30, %c0_31] : memref<1x1x32xf32, #tpu.memory_space<vmem>>, vector<1x1x32xf32>
    %67 = vector.shape_cast %66 : vector<1x1x32xf32> to vector<1x32xf32>
    %68 = vector.broadcast %67 : vector<1x32xf32> to vector<16x32xf32>
    %69 = arith.addf %59, %68 : vector<16x32xf32>
    %70 = arith.addf %69, %3 : vector<16x32xf32>
    %c0_32 = arith.constant 0 : index
    %c0_33 = arith.constant 0 : index
    %c0_34 = arith.constant 0 : index
    %71 = vector.load %arg8[%c0_32, %c0_33, %c0_34] : memref<1x1x32xf32, #tpu.memory_space<vmem>>, vector<1x1x32xf32>
    %72 = vector.shape_cast %71 : vector<1x1x32xf32> to vector<1x32xf32>
    %c0_35 = arith.constant 0 : index
    %c0_36 = arith.constant 0 : index
    %c0_37 = arith.constant 0 : index
    %73 = vector.load %arg9[%c0_35, %c0_36, %c0_37] : memref<1x1x32xf32, #tpu.memory_space<vmem>>, vector<1x1x32xf32>
    %74 = vector.shape_cast %73 : vector<1x1x32xf32> to vector<1x32xf32>
    %cst_38 = arith.constant dense<0.000000e+00> : vector<16xf32>
    %75 = vector.multi_reduction <add>, %70, %cst_38 [1] : vector<16x32xf32> to vector<16xf32>
    %76 = vector.shape_cast %75 : vector<16xf32> to vector<16x1xf32>
    %cst_39 = arith.constant 3.200000e+01 : f32
    %77 = vector.broadcast %cst_39 : f32 to vector<16x1xf32>
    %78 = arith.divf %76, %77 : vector<16x1xf32>
    %79 = vector.broadcast %78 : vector<16x1xf32> to vector<16x32xf32>
    %80 = arith.subf %70, %79 : vector<16x32xf32>
    %81 = arith.mulf %80, %80 : vector<16x32xf32>
    %cst_40 = arith.constant dense<0.000000e+00> : vector<16xf32>
    %82 = vector.multi_reduction <add>, %81, %cst_40 [1] : vector<16x32xf32> to vector<16xf32>
    %83 = vector.shape_cast %82 : vector<16xf32> to vector<16x1xf32>
    %cst_41 = arith.constant 3.200000e+01 : f32
    %84 = vector.broadcast %cst_41 : f32 to vector<16x1xf32>
    %85 = arith.divf %83, %84 : vector<16x1xf32>
    %86 = vector.broadcast %78 : vector<16x1xf32> to vector<16x32xf32>
    %87 = arith.subf %70, %86 : vector<16x32xf32>
    %cst_42 = arith.constant 9.99999996E-13 : f32
    %88 = vector.broadcast %cst_42 : f32 to vector<16x1xf32>
    %89 = arith.addf %85, %88 : vector<16x1xf32>
    %90 = math.rsqrt %89 : vector<16x1xf32>
    %91 = vector.broadcast %90 : vector<16x1xf32> to vector<16x32xf32>
    %92 = arith.mulf %87, %91 : vector<16x32xf32>
    %93 = vector.broadcast %72 : vector<1x32xf32> to vector<16x32xf32>
    %94 = arith.mulf %92, %93 : vector<16x32xf32>
    %95 = vector.broadcast %74 : vector<1x32xf32> to vector<16x32xf32>
    %96 = arith.addf %94, %95 : vector<16x32xf32>
    %c0_43 = arith.constant 0 : index
    %c0_44 = arith.constant 0 : index
    %c0_45 = arith.constant 0 : index
    %97 = vector.load %arg10[%c0_43, %c0_44, %c0_45] : memref<1x32x64xf32, #tpu.memory_space<vmem>>, vector<1x32x64xf32>
    %98 = vector.shape_cast %97 : vector<1x32x64xf32> to vector<32x64xf32>
    %cst_46 = arith.constant dense<0.000000e+00> : vector<16x64xf32>
    %99 = tpu.matmul %96, %98, %cst_46 {dimension_numbers = #tpu.dot_dimension_numbers<[1], [0], [0], [1], [0, 0, 1, 1], [], []>} : vector<16x32xf32>, vector<32x64xf32>, vector<16x64xf32> -> vector<16x64xf32>
    %c0_47 = arith.constant 0 : index
    %c0_48 = arith.constant 0 : index
    %c0_49 = arith.constant 0 : index
    %100 = vector.load %arg11[%c0_47, %c0_48, %c0_49] : memref<1x1x64xf32, #tpu.memory_space<vmem>>, vector<1x1x64xf32>
    %101 = vector.shape_cast %100 : vector<1x1x64xf32> to vector<1x64xf32>
    %102 = vector.broadcast %101 : vector<1x64xf32> to vector<16x64xf32>
    %103 = arith.addf %99, %102 : vector<16x64xf32>
    %cst_50 = arith.constant 5.000000e-01 : f32
    %104 = vector.broadcast %cst_50 : f32 to vector<16x64xf32>
    %105 = arith.mulf %104, %103 : vector<16x64xf32>
    %cst_51 = arith.constant 4.471500e-02 : f32
    %106 = vector.broadcast %cst_51 : f32 to vector<16x64xf32>
    %107 = arith.mulf %106, %103 : vector<16x64xf32>
    %108 = arith.mulf %107, %103 : vector<16x64xf32>
    %109 = arith.mulf %108, %103 : vector<16x64xf32>
    %110 = arith.addf %103, %109 : vector<16x64xf32>
    %cst_52 = arith.constant 0.797884583 : f32
    %111 = vector.broadcast %cst_52 : f32 to vector<16x64xf32>
    %112 = arith.mulf %111, %110 : vector<16x64xf32>
    %113 = math.tanh %112 : vector<16x64xf32>
    %cst_53 = arith.constant 1.000000e+00 : f32
    %114 = vector.broadcast %cst_53 : f32 to vector<16x64xf32>
    %115 = arith.addf %114, %113 : vector<16x64xf32>
    %116 = arith.mulf %105, %115 : vector<16x64xf32>
    %c0_54 = arith.constant 0 : index
    %c0_55 = arith.constant 0 : index
    %c0_56 = arith.constant 0 : index
    %117 = vector.load %arg12[%c0_54, %c0_55, %c0_56] : memref<1x64x32xf32, #tpu.memory_space<vmem>>, vector<1x64x32xf32>
    %118 = vector.shape_cast %117 : vector<1x64x32xf32> to vector<64x32xf32>
    %cst_57 = arith.constant dense<0.000000e+00> : vector<16x32xf32>
    %119 = tpu.matmul %116, %118, %cst_57 {dimension_numbers = #tpu.dot_dimension_numbers<[1], [0], [0], [1], [0, 0, 1, 1], [], []>} : vector<16x64xf32>, vector<64x32xf32>, vector<16x32xf32> -> vector<16x32xf32>
    %c0_58 = arith.constant 0 : index
    %c0_59 = arith.constant 0 : index
    %c0_60 = arith.constant 0 : index
    %120 = vector.load %arg13[%c0_58, %c0_59, %c0_60] : memref<1x1x32xf32, #tpu.memory_space<vmem>>, vector<1x1x32xf32>
    %121 = vector.shape_cast %120 : vector<1x1x32xf32> to vector<1x32xf32>
    %122 = vector.broadcast %121 : vector<1x32xf32> to vector<16x32xf32>
    %123 = arith.addf %119, %122 : vector<16x32xf32>
    %124 = arith.addf %123, %96 : vector<16x32xf32>
    %c0_61 = arith.constant 0 : index
    %c0_62 = arith.constant 0 : index
    %c0_63 = arith.constant 0 : index
    %125 = vector.load %arg14[%c0_61, %c0_62, %c0_63] : memref<1x1x32xf32, #tpu.memory_space<vmem>>, vector<1x1x32xf32>
    %126 = vector.shape_cast %125 : vector<1x1x32xf32> to vector<1x32xf32>
    %c0_64 = arith.constant 0 : index
    %c0_65 = arith.constant 0 : index
    %c0_66 = arith.constant 0 : index
    %127 = vector.load %arg15[%c0_64, %c0_65, %c0_66] : memref<1x1x32xf32, #tpu.memory_space<vmem>>, vector<1x1x32xf32>
    %128 = vector.shape_cast %127 : vector<1x1x32xf32> to vector<1x32xf32>
    %cst_67 = arith.constant dense<0.000000e+00> : vector<16xf32>
    %129 = vector.multi_reduction <add>, %124, %cst_67 [1] : vector<16x32xf32> to vector<16xf32>
    %130 = vector.shape_cast %129 : vector<16xf32> to vector<16x1xf32>
    %cst_68 = arith.constant 3.200000e+01 : f32
    %131 = vector.broadcast %cst_68 : f32 to vector<16x1xf32>
    %132 = arith.divf %130, %131 : vector<16x1xf32>
    %133 = vector.broadcast %132 : vector<16x1xf32> to vector<16x32xf32>
    %134 = arith.subf %124, %133 : vector<16x32xf32>
    %135 = arith.mulf %134, %134 : vector<16x32xf32>
    %cst_69 = arith.constant dense<0.000000e+00> : vector<16xf32>
    %136 = vector.multi_reduction <add>, %135, %cst_69 [1] : vector<16x32xf32> to vector<16xf32>
    %137 = vector.shape_cast %136 : vector<16xf32> to vector<16x1xf32>
    %cst_70 = arith.constant 3.200000e+01 : f32
    %138 = vector.broadcast %cst_70 : f32 to vector<16x1xf32>
    %139 = arith.divf %137, %138 : vector<16x1xf32>
    %140 = vector.broadcast %132 : vector<16x1xf32> to vector<16x32xf32>
    %141 = arith.subf %124, %140 : vector<16x32xf32>
    %cst_71 = arith.constant 9.99999996E-13 : f32
    %142 = vector.broadcast %cst_71 : f32 to vector<16x1xf32>
    %143 = arith.addf %139, %142 : vector<16x1xf32>
    %144 = math.rsqrt %143 : vector<16x1xf32>
    %145 = vector.broadcast %144 : vector<16x1xf32> to vector<16x32xf32>
    %146 = arith.mulf %141, %145 : vector<16x32xf32>
    %147 = vector.broadcast %126 : vector<1x32xf32> to vector<16x32xf32>
    %148 = arith.mulf %146, %147 : vector<16x32xf32>
    %149 = vector.broadcast %128 : vector<1x32xf32> to vector<16x32xf32>
    %150 = arith.addf %148, %149 : vector<16x32xf32>
    %c0_72 = arith.constant 0 : index
    %c0_73 = arith.constant 0 : index
    %151 = vector.load %arg26[%c0_72, %c0_73] : memref<16x32xf32, #tpu.memory_space<vmem>>, vector<16x32xf32>
    tpu.vector_store %arg26[%c0_72, %c0_73], %150 {strides = array<i32>} : memref<16x32xf32, #tpu.memory_space<vmem>>, vector<16x32xf32>,
    %c0_74 = arith.constant 0 : index
    %c0_75 = arith.constant 0 : index
    %152 = vector.load %arg20[%c0_74, %c0_75] : memref<32x768xf32, #tpu.memory_space<vmem>>, vector<32x768xf32>
    %cst_76 = arith.constant dense<0.000000e+00> : vector<16x768xf32>
    %153 = tpu.matmul %150, %152, %cst_76 {dimension_numbers = #tpu.dot_dimension_numbers<[1], [0], [0], [1], [0, 0, 1, 1], [], []>} : vector<16x32xf32>, vector<32x768xf32>, vector<16x768xf32> -> vector<16x768xf32>
    %c0_77 = arith.constant 0 : index
    %c0_78 = arith.constant 0 : index
    %154 = vector.load %arg21[%c0_77, %c0_78] : memref<1x768xf32, #tpu.memory_space<vmem>>, vector<1x768xf32>
    %155 = vector.broadcast %154 : vector<1x768xf32> to vector<16x768xf32>
    %156 = arith.addf %153, %155 : vector<16x768xf32>
    %c0_79 = arith.constant 0 : index
    %c0_80 = arith.constant 0 : index
    %c0_81 = arith.constant 0 : index
    %157 = vector.load %arg24[%c0_79, %c0_80, %c0_81] : memref<1x16x768xf32, #tpu.memory_space<vmem>>, vector<1x16x768xf32>
    %158 = vector.shape_cast %157 : vector<1x16x768xf32> to vector<16x768xf32>
    %159 = vector.shape_cast %156 : vector<16x768xf32> to vector<1x16x768xf32>
    tpu.vector_store %arg24[%c0_79, %c0_80, %c0_81], %159 {strides = array<i32>} : memref<1x16x768xf32, #tpu.memory_space<vmem>>, vector<1x16x768xf32>,
    %c1_i32 = arith.constant 1 : i32
    %160 = arith.cmpi eq, %arg0, %c1_i32 : i32
    %161 = arith.extui %160 : i1 to i32
    %c0_i32_82 = arith.constant 0 : i32
    %162 = arith.cmpi ne, %161, %c0_i32_82 : i32
    scf.if %162 {
      %c0_83 = arith.constant 0 : index
      %c0_84 = arith.constant 0 : index
      %163 = vector.load %arg16[%c0_83, %c0_84] : memref<32x3xf32, #tpu.memory_space<vmem>>, vector<32x3xf32>
      %cst_85 = arith.constant dense<0.000000e+00> : vector<16x3xf32>
      %164 = tpu.matmul %150, %163, %cst_85 {dimension_numbers = #tpu.dot_dimension_numbers<[1], [0], [0], [1], [0, 0, 1, 1], [], []>} : vector<16x32xf32>, vector<32x3xf32>, vector<16x3xf32> -> vector<16x3xf32>
      %c0_86 = arith.constant 0 : index
      %c0_87 = arith.constant 0 : index
      %165 = vector.load %arg17[%c0_86, %c0_87] : memref<1x3xf32, #tpu.memory_space<vmem>>, vector<1x3xf32>
      %166 = vector.broadcast %165 : vector<1x3xf32> to vector<16x3xf32>
      %167 = arith.addf %164, %166 : vector<16x3xf32>
      %c0_88 = arith.constant 0 : index
      %c0_89 = arith.constant 0 : index
      %168 = vector.load %arg22[%c0_88, %c0_89] : memref<16x3xf32, #tpu.memory_space<vmem>>, vector<16x3xf32>
      tpu.vector_store %arg22[%c0_88, %c0_89], %167 {strides = array<i32>} : memref<16x3xf32, #tpu.memory_space<vmem>>, vector<16x3xf32>,
    } else {
    }
    return
  }
  func.func @transform_0(%arg0: i32) -> (i32, i32) {
    %c0_i32 = arith.constant 0 : i32
    %c0_i32_0 = arith.constant 0 : i32
    %c0_i32_1 = arith.constant 0 : i32
    return %c0_i32, %c0_i32_0 : i32, i32
  }
  func.func @transform_1(%arg0: i32) -> (i32, i32) {
    %c0_i32 = arith.constant 0 : i32
    %c0_i32_0 = arith.constant 0 : i32
    %c0_i32_1 = arith.constant 0 : i32
    return %c0_i32, %c0_i32_0 : i32, i32
  }
  func.func @transform_2(%arg0: i32) -> (i32, i32) {
    %c0_i32 = arith.constant 0 : i32
    %c0_i32_0 = arith.constant 0 : i32
    %c0_i32_1 = arith.constant 0 : i32
    return %c0_i32, %c0_i32_0 : i32, i32
  }
  func.func @transform_3(%arg0: i32) -> (i32, i32, i32) {
    %c0_i32 = arith.constant 0 : i32
    %c0_i32_0 = arith.constant 0 : i32
    %c0_i32_1 = arith.constant 0 : i32
    return %arg0, %c0_i32, %c0_i32_0 : i32, i32, i32
  }
  func.func @transform_4(%arg0: i32) -> (i32, i32, i32) {
    %c0_i32 = arith.constant 0 : i32
    %c0_i32_0 = arith.constant 0 : i32
    %c0_i32_1 = arith.constant 0 : i32
    return %arg0, %c0_i32, %c0_i32_0 : i32, i32, i32
  }
  func.func @transform_5(%arg0: i32) -> (i32, i32, i32) {
    %c0_i32 = arith.constant 0 : i32
    %c0_i32_0 = arith.constant 0 : i32
    %c0_i32_1 = arith.constant 0 : i32
    return %arg0, %c0_i32, %c0_i32_0 : i32, i32, i32
  }
  func.func @transform_6(%arg0: i32) -> (i32, i32, i32) {
    %c0_i32 = arith.constant 0 : i32
    %c0_i32_0 = arith.constant 0 : i32
    %c0_i32_1 = arith.constant 0 : i32
    return %arg0, %c0_i32, %c0_i32_0 : i32, i32, i32
  }
  func.func @transform_7(%arg0: i32) -> (i32, i32, i32) {
    %c0_i32 = arith.constant 0 : i32
    %c0_i32_0 = arith.constant 0 : i32
    %c0_i32_1 = arith.constant 0 : i32
    return %arg0, %c0_i32, %c0_i32_0 : i32, i32, i32
  }
  func.func @transform_8(%arg0: i32) -> (i32, i32, i32) {
    %c0_i32 = arith.constant 0 : i32
    %c0_i32_0 = arith.constant 0 : i32
    %c0_i32_1 = arith.constant 0 : i32
    return %arg0, %c0_i32, %c0_i32_0 : i32, i32, i32
  }
  func.func @transform_9(%arg0: i32) -> (i32, i32, i32) {
    %c0_i32 = arith.constant 0 : i32
    %c0_i32_0 = arith.constant 0 : i32
    %c0_i32_1 = arith.constant 0 : i32
    return %arg0, %c0_i32, %c0_i32_0 : i32, i32, i32
  }
  func.func @transform_10(%arg0: i32) -> (i32, i32, i32) {
    %c0_i32 = arith.constant 0 : i32
    %c0_i32_0 = arith.constant 0 : i32
    %c0_i32_1 = arith.constant 0 : i32
    return %arg0, %c0_i32, %c0_i32_0 : i32, i32, i32
  }
  func.func @transform_11(%arg0: i32) -> (i32, i32, i32) {
    %c0_i32 = arith.constant 0 : i32
    %c0_i32_0 = arith.constant 0 : i32
    %c0_i32_1 = arith.constant 0 : i32
    return %arg0, %c0_i32, %c0_i32_0 : i32, i32, i32
  }
  func.func @transform_12(%arg0: i32) -> (i32, i32, i32) {
    %c0_i32 = arith.constant 0 : i32
    %c0_i32_0 = arith.constant 0 : i32
    %c0_i32_1 = arith.constant 0 : i32
    return %arg0, %c0_i32, %c0_i32_0 : i32, i32, i32
  }
  func.func @transform_13(%arg0: i32) -> (i32, i32, i32) {
    %c0_i32 = arith.constant 0 : i32
    %c0_i32_0 = arith.constant 0 : i32
    %c0_i32_1 = arith.constant 0 : i32
    return %arg0, %c0_i32, %c0_i32_0 : i32, i32, i32
  }
  func.func @transform_14(%arg0: i32) -> (i32, i32, i32) {
    %c0_i32 = arith.constant 0 : i32
    %c0_i32_0 = arith.constant 0 : i32
    %c0_i32_1 = arith.constant 0 : i32
    return %arg0, %c0_i32, %c0_i32_0 : i32, i32, i32
  }
  func.func @transform_15(%arg0: i32) -> (i32, i32) {
    %c0_i32 = arith.constant 0 : i32
    %c0_i32_0 = arith.constant 0 : i32
    %c0_i32_1 = arith.constant 0 : i32
    return %c0_i32, %c0_i32_0 : i32, i32
  }
  func.func @transform_16(%arg0: i32) -> (i32, i32) {
    %c0_i32 = arith.constant 0 : i32
    %c0_i32_0 = arith.constant 0 : i32
    %c0_i32_1 = arith.constant 0 : i32
    return %c0_i32, %c0_i32_0 : i32, i32
  }
  func.func @transform_17(%arg0: i32) -> (i32, i32) {
    %c0_i32 = arith.constant 0 : i32
    %c0_i32_0 = arith.constant 0 : i32
    %c0_i32_1 = arith.constant 0 : i32
    return %c0_i32, %c0_i32_0 : i32, i32
  }
  func.func @transform_18(%arg0: i32) -> (i32, i32) {
    %c0_i32 = arith.constant 0 : i32
    %c0_i32_0 = arith.constant 0 : i32
    %c0_i32_1 = arith.constant 0 : i32
    return %c0_i32, %c0_i32_0 : i32, i32
  }
  func.func @transform_19(%arg0: i32) -> (i32, i32) {
    %c0_i32 = arith.constant 0 : i32
    %c0_i32_0 = arith.constant 0 : i32
    %c0_i32_1 = arith.constant 0 : i32
    return %c0_i32, %c0_i32_0 : i32, i32
  }
  func.func @transform_20(%arg0: i32) -> (i32, i32) {
    %c0_i32 = arith.constant 0 : i32
    %c0_i32_0 = arith.constant 0 : i32
    %c0_i32_1 = arith.constant 0 : i32
    return %c0_i32, %c0_i32_0 : i32, i32
  }
  func.func @transform_21(%arg0: i32) -> (i32, i32) {
    %c0_i32 = arith.constant 0 : i32
    %c0_i32_0 = arith.constant 0 : i32
    %c0_i32_1 = arith.constant 0 : i32
    return %c0_i32, %c0_i32_0 : i32, i32
  }
  func.func @transform_22(%arg0: i32) -> (i32, i32) {
    %c0_i32 = arith.constant 0 : i32
    %c0_i32_0 = arith.constant 0 : i32
    %c0_i32_1 = arith.constant 0 : i32
    return %c0_i32, %c0_i32_0 : i32, i32
  }
  func.func @transform_23(%arg0: i32) -> (i32, i32, i32) {
    %c0_i32 = arith.constant 0 : i32
    %c0_i32_0 = arith.constant 0 : i32
    %c0_i32_1 = arith.constant 0 : i32
    return %arg0, %c0_i32, %c0_i32_0 : i32, i32, i32
  }
  func.func @transform_24(%arg0: i32) -> (i32, i32, i32, i32, i32) {
    %c0_i32 = arith.constant 0 : i32
    %c0_i32_0 = arith.constant 0 : i32
    %c0_i32_1 = arith.constant 0 : i32
    %c0_i32_2 = arith.constant 0 : i32
    %c0_i32_3 = arith.constant 0 : i32
    return %arg0, %c0_i32, %c0_i32_0, %c0_i32_1, %c0_i32_2 : i32, i32, i32, i32, i32
  }
}

</mosaic_0001>

<llo_original>
// kernel: tinybert_forward.1
$region0: #{tinybert_forward.1}
  #allocation0 [shape = 'u32[]', space=smem, size = 0x4, offset = 0x4, fixed_abs, tag = 'smem constant byte address 0x4 - core index']
  #allocation1 [shape = 'u32[72,128]{1,0:T(1,128)}', space=vmem, size = 0x9000, scoped, tag = 'internal scratch']
  #allocation2 [shape = 'f32[16,32]{1,0:T(8,128)}', space=vmem, size = 0x2000, scoped, tag = 'scratch operand']
  %s0 = inlined_call_operand.vmem [shape: f32[16,32], index: 0, kind: input, shape index: {}]
  %s1 = inlined_call_operand.vmem [shape: f32[1,32], index: 1, kind: input, shape index: {}]
  %s2 = inlined_call_operand.vmem [shape: f32[1,32], index: 2, kind: input, shape index: {}]
  %s3 = inlined_call_operand.hbm [shape: f32[2,32,96], index: 3, kind: input, shape index: {}]
  %s4 = inlined_call_operand.vmem [shape: f32[2,1,96], index: 4, kind: input, shape index: {}]
  %s5 = inlined_call_operand.hbm [shape: f32[2,32,32], index: 5, kind: input, shape index: {}]
  %s6 = inlined_call_operand.vmem [shape: f32[2,1,32], index: 6, kind: input, shape index: {}]
  %s7 = inlined_call_operand.vmem [shape: f32[2,1,32], index: 7, kind: input, shape index: {}]
  %s8 = inlined_call_operand.vmem [shape: f32[2,1,32], index: 8, kind: input, shape index: {}]
  %s9 = inlined_call_operand.hbm [shape: f32[2,32,64], index: 9, kind: input, shape index: {}]
  %s10 = inlined_call_operand.vmem [shape: f32[2,1,64], index: 10, kind: input, shape index: {}]
  %s11 = inlined_call_operand.vmem [shape: f32[2,64,32], index: 11, kind: input, shape index: {}]
  %s12 = inlined_call_operand.vmem [shape: f32[2,1,32], index: 12, kind: input, shape index: {}]
  %s13 = inlined_call_operand.vmem [shape: f32[2,1,32], index: 13, kind: input, shape index: {}]
  %s14 = inlined_call_operand.vmem [shape: f32[2,1,32], index: 14, kind: input, shape index: {}]
  %s15 = inlined_call_operand.vmem [shape: f32[32,3], index: 15, kind: input, shape index: {}]
  %s16 = inlined_call_operand.vmem [shape: f32[1,3], index: 16, kind: input, shape index: {}]
  %s17 = inlined_call_operand.vmem [shape: f32[32,768], index: 17, kind: input, shape index: {}]
  %s18 = inlined_call_operand.vmem [shape: f32[1,768], index: 18, kind: input, shape index: {}]
  %s19 = inlined_call_operand.vmem [shape: f32[32,768], index: 19, kind: input, shape index: {}]
  %s20 = inlined_call_operand.vmem [shape: f32[1,768], index: 20, kind: input, shape index: {}]
  %s21 = inlined_call_operand.vmem [shape: f32[16,3], index: 21, kind: output, shape index: {0}]
  %s22 = inlined_call_operand.hbm [shape: f32[16,768], index: 22, kind: output, shape index: {1}]
  %s23 = inlined_call_operand.vmem [shape: f32[2,16,768], index: 23, kind: output, shape index: {2}]
  %s24 = inlined_call_operand.vmem [shape: f32[2,2,2,8,8], index: 24, kind: output, shape index: {3}]
  %25 = xla_tuple %s21, %s22, %s23, %s24
  %s26 = sld [smem:[#allocation0]]
  $region161: #{tinybert_forward.1} parent=0
    _
  %s28 = ssub.s32 1, %s26
  %s29 = scalar_select 0, %s28, %s26
  $region1: #{tinybert_forward.1} parent=0
    #allocation3 [shape = 'u8[32768]{0}', space=vmem, size = 0x8000, scoped, tag = 'input window, operand 3']
    #allocation4 [shape = 's32[2]{0}', space=sflag, size = 0x8, scoped, tag = 'scoped memory for tinybert_forward.1']
    #allocation5 [shape = 's32[2]{0}', space=sflag, size = 0x8, scoped, tag = 'scoped memory for tinybert_forward.1']
    #allocation6 [shape = 'u8[32768]{0}', space=vmem, size = 0x8000, scoped, tag = 'input window, operand 5']
    #allocation7 [shape = 's32[2]{0}', space=sflag, size = 0x8, scoped, tag = 'scoped memory for tinybert_forward.1']
    #allocation8 [shape = 'u8[32768]{0}', space=vmem, size = 0x8000, scoped, tag = 'input window, operand 9']
    #allocation9 [shape = 'u8[49152]{0}', space=vmem, size = 0xc000, scoped, tag = 'output window, operand 1, single buffered']
    %30 = vsyncpa [#allocation4], 0
    %s31 = scalar_lea.sflag [#allocation4], 1
    %32 = vsyncpa %s31, 0
    %33 = vsyncpa [#allocation7], 0
    %s34 = scalar_lea.sflag [#allocation7], 1
    %35 = vsyncpa %s34, 0
    %36 = vsyncpa [#allocation5], 0
    loop: start=0, step=1, limit=4
    $region2: #{tinybert_forward.1} parent=1 // loop_pre_header
      _
    $region3: #{tinybert_forward.1} parent=1 // loop_header
      %s38 = sphi 0, %s42
      %p39 = scmp.ge.s32.totalorder %s38, 4
      %s46 = sphi 0, %s46
      %s48 = sphi 0, %s46
      %s49 = sphi 0, %s48
      %s63 = sphi 0, %s49
      %s67 = sphi 0, %s67
      %s69 = sphi 0, %s67
      %s70 = sphi 0, %s69
      %s84 = sphi 0, %s70
      %s88 = sphi 0, %s88
      %s90 = sphi 0, %s88
      %s91 = sphi 0, %s90
      %s105 = sphi 0, %s91
      %s111 = sphi 0, %s113
      %s114 = sphi 0, %s111
      %s115 = sphi 0, %s114
      %s131 = sphi 0, %s115
      %s137 = sphi 0, %s139
      %s140 = sphi 0, %s137
      %s141 = sphi 0, %s140
      %s157 = sphi 0, %s141
      %s163 = sphi 0, %s165
      %s166 = sphi 0, %s163
      %s167 = sphi 0, %s166
      %s183 = sphi 0, %s167
      %s189 = sphi 0, %s191
      %s192 = sphi 0, %s189
      %s193 = sphi 0, %s192
      %s209 = sphi 0, %s193
      %s215 = sphi 0, %s217
      %s218 = sphi 0, %s215
      %s219 = sphi 0, %s218
      %s235 = sphi 0, %s219
      %s241 = sphi 0, %s243
      %s244 = sphi 0, %s241
      %s245 = sphi 0, %s244
      %s261 = sphi 0, %s245
      %s267 = sphi 0, %s269
      %s270 = sphi 0, %s267
      %s271 = sphi 0, %s270
      %s287 = sphi 0, %s271
      %s293 = sphi 0, %s295
      %s296 = sphi 0, %s293
      %s297 = sphi 0, %s296
      %s313 = sphi 0, %s297
      %s319 = sphi 0, %s321
      %s322 = sphi 0, %s319
      %s323 = sphi 0, %s322
      %s339 = sphi 0, %s323
      %s345 = sphi 0, %s347
      %s348 = sphi 0, %s345
      %s349 = sphi 0, %s348
      %s365 = sphi 0, %s349
      %s371 = sphi 0, %s373
      %s374 = sphi 0, %s371
      %s375 = sphi 0, %s374
      %s391 = sphi 0, %s375
      %s397 = sphi 0, %s399
      %s400 = sphi 0, %s397
      %s401 = sphi 0, %s400
      %s417 = sphi 0, %s401
      %s421 = sphi 0, %s421
      %s423 = sphi 0, %s421
      %s424 = sphi 0, %s423
      %s438 = sphi 0, %s424
      %s442 = sphi 0, %s442
      %s444 = sphi 0, %s442
      %s445 = sphi 0, %s444
      %s459 = sphi 0, %s445
      %s463 = sphi 0, %s463
      %s465 = sphi 0, %s463
      %s466 = sphi 0, %s465
      %s480 = sphi 0, %s466
      %s484 = sphi 0, %s484
      %s486 = sphi 0, %s484
      %s487 = sphi 0, %s486
      %s501 = sphi 0, %s487
      %s505 = sphi 0, %s505
      %s507 = sphi 0, %s505
      %s508 = sphi 0, %s507
      %s522 = sphi 0, %s508
      %s526 = sphi 0, %s526
      %s528 = sphi 0, %s526
      %s529 = sphi 0, %s528
      %s543 = sphi 0, %s529
      %s547 = sphi 0, %s547
      %s549 = sphi 0, %s547
      %s550 = sphi 0, %s549
      %s564 = sphi 0, %s550
      %s568 = sphi 0, %s568
      %s570 = sphi 0, %s568
      %s571 = sphi 0, %s570
      %s585 = sphi 0, %s571
      %s591 = sphi 0, %s593
      %s594 = sphi 0, %s591
      %s595 = sphi 0, %s594
      %s611 = sphi 0, %s595
      %s617 = sphi 0, %s619
      %s620 = sphi 0, %s617
      %s621 = sphi 0, %s620
      %s637 = sphi 0, %s621
    $region4: #{tinybert_forward.1} parent=1 // loop_header_branch
      %41 = sbr.rel (%p39) target = $region8
    $region5: #{tinybert_forward.1} parent=1 // loop_body
      %s43 = ssub.s32 %s38, 1
      %s44 = ssub.s32 %s38, 2
      %s45 = sadd.s32 %s38, 1
      %s47 = sadd.s32 %s46, 1
      %p50 = scmp.eq.s32.totalorder %s38, 1
      %p51 = scmp.ne.s32.totalorder %s46, %s48
      %p52 = scmp.eq.s32.totalorder %s38, 0
      %p53 = por %p51, %p52
      %p54 = scmp.ne.s32.totalorder %s46, %s48
      %p55 = scmp.eq.s32.totalorder %s43, 1
      %p56 = por %p54, %p55
      %p57 = scmp.ne.s32.totalorder %s48, %s49
      %p58 = scmp.eq.s32.totalorder %s43, 0
      %p59 = por %p57, %p58
      %p60 = scmp.ne.s32.totalorder %s48, %s49
      %p61 = scmp.eq.s32.totalorder %s44, 1
      %p62 = por %p60, %p61
      %p64 = scmp.ne.s32.totalorder %s49, %s63
      %p65 = scmp.eq.s32.totalorder %s44, 0
      %p66 = por %p64, %p65
      %s68 = sadd.s32 %s67, 1
      %p71 = scmp.eq.s32.totalorder %s38, 1
      %p72 = scmp.ne.s32.totalorder %s67, %s69
      %p73 = scmp.eq.s32.totalorder %s38, 0
      %p74 = por %p72, %p73
      %p75 = scmp.ne.s32.totalorder %s67, %s69
      %p76 = scmp.eq.s32.totalorder %s43, 1
      %p77 = por %p75, %p76
      %p78 = scmp.ne.s32.totalorder %s69, %s70
      %p79 = scmp.eq.s32.totalorder %s43, 0
      %p80 = por %p78, %p79
      %p81 = scmp.ne.s32.totalorder %s69, %s70
      %p82 = scmp.eq.s32.totalorder %s44, 1
      %p83 = por %p81, %p82
      %p85 = scmp.ne.s32.totalorder %s70, %s84
      %p86 = scmp.eq.s32.totalorder %s44, 0
      %p87 = por %p85, %p86
      %s89 = sadd.s32 %s88, 1
      %p92 = scmp.eq.s32.totalorder %s38, 1
      %p93 = scmp.ne.s32.totalorder %s88, %s90
      %p94 = scmp.eq.s32.totalorder %s38, 0
      %p95 = por %p93, %p94
      %p96 = scmp.ne.s32.totalorder %s88, %s90
      %p97 = scmp.eq.s32.totalorder %s43, 1
      %p98 = por %p96, %p97
      %p99 = scmp.ne.s32.totalorder %s90, %s91
      %p100 = scmp.eq.s32.totalorder %s43, 0
      %p101 = por %p99, %p100
      %p102 = scmp.ne.s32.totalorder %s90, %s91
      %p103 = scmp.eq.s32.totalorder %s44, 1
      %p104 = por %p102, %p103
      %p106 = scmp.ne.s32.totalorder %s91, %s105
      %p107 = scmp.eq.s32.totalorder %s44, 0
      %p108 = por %p106, %p107
      %s109 = ssub.s32 %s38, %s45
      %p110 = scmp.eq.s32.totalorder %s109, 0
      %s112 = sadd.s32 %s111, 1
      %s113 = scalar_select %p110, %s111, %s112
      %p116 = pneg %p110
      %p117 = scmp.eq.s32.totalorder %s38, 1
      %p118 = por %p116, %p117
      %p119 = scmp.ne.s32.totalorder %s111, %s114
      %p120 = scmp.eq.s32.totalorder %s38, 0
      %p121 = por %p119, %p120
      %p122 = scmp.ne.s32.totalorder %s111, %s114
      %p123 = scmp.eq.s32.totalorder %s43, 1
      %p124 = por %p122, %p123
      %p125 = scmp.ne.s32.totalorder %s114, %s115
      %p126 = scmp.eq.s32.totalorder %s43, 0
      %p127 = por %p125, %p126
      %p128 = scmp.ne.s32.totalorder %s114, %s115
      %p129 = scmp.eq.s32.totalorder %s44, 1
      %p130 = por %p128, %p129
      %p132 = scmp.ne.s32.totalorder %s115, %s131
      %p133 = scmp.eq.s32.totalorder %s44, 0
      %p134 = por %p132, %p133
      %s135 = ssub.s32 %s38, %s45
      %p136 = scmp.eq.s32.totalorder %s135, 0
      %s138 = sadd.s32 %s137, 1
      %s139 = scalar_select %p136, %s137, %s138
      %p142 = pneg %p136
      %p143 = scmp.eq.s32.totalorder %s38, 1
      %p144 = por %p142, %p143
      %p145 = scmp.ne.s32.totalorder %s137, %s140
      %p146 = scmp.eq.s32.totalorder %s38, 0
      %p147 = por %p145, %p146
      %p148 = scmp.ne.s32.totalorder %s137, %s140
      %p149 = scmp.eq.s32.totalorder %s43, 1
      %p150 = por %p148, %p149
      %p151 = scmp.ne.s32.totalorder %s140, %s141
      %p152 = scmp.eq.s32.totalorder %s43, 0
      %p153 = por %p151, %p152
      %p154 = scmp.ne.s32.totalorder %s140, %s141
      %p155 = scmp.eq.s32.totalorder %s44, 1
      %p156 = por %p154, %p155
      %p158 = scmp.ne.s32.totalorder %s141, %s157
      %p159 = scmp.eq.s32.totalorder %s44, 0
      %p160 = por %p158, %p159
      %s161 = ssub.s32 %s38, %s45
      %p162 = scmp.eq.s32.totalorder %s161, 0
      %s164 = sadd.s32 %s163, 1
      %s165 = scalar_select %p162, %s163, %s164
      %p168 = pneg %p162
      %p169 = scmp.eq.s32.totalorder %s38, 1
      %p170 = por %p168, %p169
      %p171 = scmp.ne.s32.totalorder %s163, %s166
      %p172 = scmp.eq.s32.totalorder %s38, 0
      %p173 = por %p171, %p172
      %p174 = scmp.ne.s32.totalorder %s163, %s166
      %p175 = scmp.eq.s32.totalorder %s43, 1
      %p176 = por %p174, %p175
      %p177 = scmp.ne.s32.totalorder %s166, %s167
      %p178 = scmp.eq.s32.totalorder %s43, 0
      %p179 = por %p177, %p178
      %p180 = scmp.ne.s32.totalorder %s166, %s167
      %p181 = scmp.eq.s32.totalorder %s44, 1
      %p182 = por %p180, %p181
      %p184 = scmp.ne.s32.totalorder %s167, %s183
      %p185 = scmp.eq.s32.totalorder %s44, 0
      %p186 = por %p184, %p185
      %s187 = ssub.s32 %s38, %s45
      %p188 = scmp.eq.s32.totalorder %s187, 0
      %s190 = sadd.s32 %s189, 1
      %s191 = scalar_select %p188, %s189, %s190
      %p194 = pneg %p188
      %p195 = scmp.eq.s32.totalorder %s38, 1
      %p196 = por %p194, %p195
      %p197 = scmp.ne.s32.totalorder %s189, %s192
      %p198 = scmp.eq.s32.totalorder %s38, 0
      %p199 = por %p197, %p198
      %p200 = scmp.ne.s32.totalorder %s189, %s192
      %p201 = scmp.eq.s32.totalorder %s43, 1
      %p202 = por %p200, %p201
      %p203 = scmp.ne.s32.totalorder %s192, %s193
      %p204 = scmp.eq.s32.totalorder %s43, 0
      %p205 = por %p203, %p204
      %p206 = scmp.ne.s32.totalorder %s192, %s193
      %p207 = scmp.eq.s32.totalorder %s44, 1
      %p208 = por %p206, %p207
      %p210 = scmp.ne.s32.totalorder %s193, %s209
      %p211 = scmp.eq.s32.totalorder %s44, 0
      %p212 = por %p210, %p211
      %s213 = ssub.s32 %s38, %s45
      %p214 = scmp.eq.s32.totalorder %s213, 0
      %s216 = sadd.s32 %s215, 1
      %s217 = scalar_select %p214, %s215, %s216
      %p220 = pneg %p214
      %p221 = scmp.eq.s32.totalorder %s38, 1
      %p222 = por %p220, %p221
      %p223 = scmp.ne.s32.totalorder %s215, %s218
      %p224 = scmp.eq.s32.totalorder %s38, 0
      %p225 = por %p223, %p224
      %p226 = scmp.ne.s32.totalorder %s215, %s218
      %p227 = scmp.eq.s32.totalorder %s43, 1
      %p228 = por %p226, %p227
      %p229 = scmp.ne.s32.totalorder %s218, %s219
      %p230 = scmp.eq.s32.totalorder %s43, 0
      %p231 = por %p229, %p230
      %p232 = scmp.ne.s32.totalorder %s218, %s219
      %p233 = scmp.eq.s32.totalorder %s44, 1
      %p234 = por %p232, %p233
      %p236 = scmp.ne.s32.totalorder %s219, %s235
      %p237 = scmp.eq.s32.totalorder %s44, 0
      %p238 = por %p236, %p237
      %s239 = ssub.s32 %s38, %s45
      %p240 = scmp.eq.s32.totalorder %s239, 0
      %s242 = sadd.s32 %s241, 1
      %s243 = scalar_select %p240, %s241, %s242
      %p246 = pneg %p240
      %p247 = scmp.eq.s32.totalorder %s38, 1
      %p248 = por %p246, %p247
      %p249 = scmp.ne.s32.totalorder %s241, %s244
      %p250 = scmp.eq.s32.totalorder %s38, 0
      %p251 = por %p249, %p250
      %p252 = scmp.ne.s32.totalorder %s241, %s244
      %p253 = scmp.eq.s32.totalorder %s43, 1
      %p254 = por %p252, %p253
      %p255 = scmp.ne.s32.totalorder %s244, %s245
      %p256 = scmp.eq.s32.totalorder %s43, 0
      %p257 = por %p255, %p256
      %p258 = scmp.ne.s32.totalorder %s244, %s245
      %p259 = scmp.eq.s32.totalorder %s44, 1
      %p260 = por %p258, %p259
      %p262 = scmp.ne.s32.totalorder %s245, %s261
      %p263 = scmp.eq.s32.totalorder %s44, 0
      %p264 = por %p262, %p263
      %s265 = ssub.s32 %s38, %s45
      %p266 = scmp.eq.s32.totalorder %s265, 0
      %s268 = sadd.s32 %s267, 1
      %s269 = scalar_select %p266, %s267, %s268
      %p272 = pneg %p266
      %p273 = scmp.eq.s32.totalorder %s38, 1
      %p274 = por %p272, %p273
      %p275 = scmp.ne.s32.totalorder %s267, %s270
      %p276 = scmp.eq.s32.totalorder %s38, 0
      %p277 = por %p275, %p276
      %p278 = scmp.ne.s32.totalorder %s267, %s270
      %p279 = scmp.eq.s32.totalorder %s43, 1
      %p280 = por %p278, %p279
      %p281 = scmp.ne.s32.totalorder %s270, %s271
      %p282 = scmp.eq.s32.totalorder %s43, 0
      %p283 = por %p281, %p282
      %p284 = scmp.ne.s32.totalorder %s270, %s271
      %p285 = scmp.eq.s32.totalorder %s44, 1
      %p286 = por %p284, %p285
      %p288 = scmp.ne.s32.totalorder %s271, %s287
      %p289 = scmp.eq.s32.totalorder %s44, 0
      %p290 = por %p288, %p289
      %s291 = ssub.s32 %s38, %s45
      %p292 = scmp.eq.s32.totalorder %s291, 0
      %s294 = sadd.s32 %s293, 1
      %s295 = scalar_select %p292, %s293, %s294
      %p298 = pneg %p292
      %p299 = scmp.eq.s32.totalorder %s38, 1
      %p300 = por %p298, %p299
      %p301 = scmp.ne.s32.totalorder %s293, %s296
      %p302 = scmp.eq.s32.totalorder %s38, 0
      %p303 = por %p301, %p302
      %p304 = scmp.ne.s32.totalorder %s293, %s296
      %p305 = scmp.eq.s32.totalorder %s43, 1
      %p306 = por %p304, %p305
      %p307 = scmp.ne.s32.totalorder %s296, %s297
      %p308 = scmp.eq.s32.totalorder %s43, 0
      %p309 = por %p307, %p308
      %p310 = scmp.ne.s32.totalorder %s296, %s297
      %p311 = scmp.eq.s32.totalorder %s44, 1
      %p312 = por %p310, %p311
      %p314 = scmp.ne.s32.totalorder %s297, %s313
      %p315 = scmp.eq.s32.totalorder %s44, 0
      %p316 = por %p314, %p315
      %s317 = ssub.s32 %s38, %s45
      %p318 = scmp.eq.s32.totalorder %s317, 0
      %s320 = sadd.s32 %s319, 1
      %s321 = scalar_select %p318, %s319, %s320
      %p324 = pneg %p318
      %p325 = scmp.eq.s32.totalorder %s38, 1
      %p326 = por %p324, %p325
      %p327 = scmp.ne.s32.totalorder %s319, %s322
      %p328 = scmp.eq.s32.totalorder %s38, 0
      %p329 = por %p327, %p328
      %p330 = scmp.ne.s32.totalorder %s319, %s322
      %p331 = scmp.eq.s32.totalorder %s43, 1
      %p332 = por %p330, %p331
      %p333 = scmp.ne.s32.totalorder %s322, %s323
      %p334 = scmp.eq.s32.totalorder %s43, 0
      %p335 = por %p333, %p334
      %p336 = scmp.ne.s32.totalorder %s322, %s323
      %p337 = scmp.eq.s32.totalorder %s44, 1
      %p338 = por %p336, %p337
      %p340 = scmp.ne.s32.totalorder %s323, %s339
      %p341 = scmp.eq.s32.totalorder %s44, 0
      %p342 = por %p340, %p341
      %s343 = ssub.s32 %s38, %s45
      %p344 = scmp.eq.s32.totalorder %s343, 0
      %s346 = sadd.s32 %s345, 1
      %s347 = scalar_select %p344, %s345, %s346
      %p350 = pneg %p344
      %p351 = scmp.eq.s32.totalorder %s38, 1
      %p352 = por %p350, %p351
      %p353 = scmp.ne.s32.totalorder %s345, %s348
      %p354 = scmp.eq.s32.totalorder %s38, 0
      %p355 = por %p353, %p354
      %p356 = scmp.ne.s32.totalorder %s345, %s348
      %p357 = scmp.eq.s32.totalorder %s43, 1
      %p358 = por %p356, %p357
      %p359 = scmp.ne.s32.totalorder %s348, %s349
      %p360 = scmp.eq.s32.totalorder %s43, 0
      %p361 = por %p359, %p360
      %p362 = scmp.ne.s32.totalorder %s348, %s349
      %p363 = scmp.eq.s32.totalorder %s44, 1
      %p364 = por %p362, %p363
      %p366 = scmp.ne.s32.totalorder %s349, %s365
      %p367 = scmp.eq.s32.totalorder %s44, 0
      %p368 = por %p366, %p367
      %s369 = ssub.s32 %s38, %s45
      %p370 = scmp.eq.s32.totalorder %s369, 0
      %s372 = sadd.s32 %s371, 1
      %s373 = scalar_select %p370, %s371, %s372
      %p376 = pneg %p370
      %p377 = scmp.eq.s32.totalorder %s38, 1
      %p378 = por %p376, %p377
      %p379 = scmp.ne.s32.totalorder %s371, %s374
      %p380 = scmp.eq.s32.totalorder %s38, 0
      %p381 = por %p379, %p380
      %p382 = scmp.ne.s32.totalorder %s371, %s374
      %p383 = scmp.eq.s32.totalorder %s43, 1
      %p384 = por %p382, %p383
      %p385 = scmp.ne.s32.totalorder %s374, %s375
      %p386 = scmp.eq.s32.totalorder %s43, 0
      %p387 = por %p385, %p386
      %p388 = scmp.ne.s32.totalorder %s374, %s375
      %p389 = scmp.eq.s32.totalorder %s44, 1
      %p390 = por %p388, %p389
      %p392 = scmp.ne.s32.totalorder %s375, %s391
      %p393 = scmp.eq.s32.totalorder %s44, 0
      %p394 = por %p392, %p393
      %s395 = ssub.s32 %s38, %s45
      %p396 = scmp.eq.s32.totalorder %s395, 0
      %s398 = sadd.s32 %s397, 1
      %s399 = scalar_select %p396, %s397, %s398
      %p402 = pneg %p396
      %p403 = scmp.eq.s32.totalorder %s38, 1
      %p404 = por %p402, %p403
      %p405 = scmp.ne.s32.totalorder %s397, %s400
      %p406 = scmp.eq.s32.totalorder %s38, 0
      %p407 = por %p405, %p406
      %p408 = scmp.ne.s32.totalorder %s397, %s400
      %p409 = scmp.eq.s32.totalorder %s43, 1
      %p410 = por %p408, %p409
      %p411 = scmp.ne.s32.totalorder %s400, %s401
      %p412 = scmp.eq.s32.totalorder %s43, 0
      %p413 = por %p411, %p412
      %p414 = scmp.ne.s32.totalorder %s400, %s401
      %p415 = scmp.eq.s32.totalorder %s44, 1
      %p416 = por %p414, %p415
      %p418 = scmp.ne.s32.totalorder %s401, %s417
      %p419 = scmp.eq.s32.totalorder %s44, 0
      %p420 = por %p418, %p419
      %s422 = sadd.s32 %s421, 1
      %p425 = scmp.eq.s32.totalorder %s38, 1
      %p426 = scmp.ne.s32.totalorder %s421, %s423
      %p427 = scmp.eq.s32.totalorder %s38, 0
      %p428 = por %p426, %p427
      %p429 = scmp.ne.s32.totalorder %s421, %s423
      %p430 = scmp.eq.s32.totalorder %s43, 1
      %p431 = por %p429, %p430
      %p432 = scmp.ne.s32.totalorder %s423, %s424
      %p433 = scmp.eq.s32.totalorder %s43, 0
      %p434 = por %p432, %p433
      %p435 = scmp.ne.s32.totalorder %s423, %s424
      %p436 = scmp.eq.s32.totalorder %s44, 1
      %p437 = por %p435, %p436
      %p439 = scmp.ne.s32.totalorder %s424, %s438
      %p440 = scmp.eq.s32.totalorder %s44, 0
      %p441 = por %p439, %p440
      %s443 = sadd.s32 %s442, 1
      %p446 = scmp.eq.s32.totalorder %s38, 1
      %p447 = scmp.ne.s32.totalorder %s442, %s444
      %p448 = scmp.eq.s32.totalorder %s38, 0
      %p449 = por %p447, %p448
      %p450 = scmp.ne.s32.totalorder %s442, %s444
      %p451 = scmp.eq.s32.totalorder %s43, 1
      %p452 = por %p450, %p451
      %p453 = scmp.ne.s32.totalorder %s444, %s445
      %p454 = scmp.eq.s32.totalorder %s43, 0
      %p455 = por %p453, %p454
      %p456 = scmp.ne.s32.totalorder %s444, %s445
      %p457 = scmp.eq.s32.totalorder %s44, 1
      %p458 = por %p456, %p457
      %p460 = scmp.ne.s32.totalorder %s445, %s459
      %p461 = scmp.eq.s32.totalorder %s44, 0
      %p462 = por %p460, %p461
      %s464 = sadd.s32 %s463, 1
      %p467 = scmp.eq.s32.totalorder %s38, 1
      %p468 = scmp.ne.s32.totalorder %s463, %s465
      %p469 = scmp.eq.s32.totalorder %s38, 0
      %p470 = por %p468, %p469
      %p471 = scmp.ne.s32.totalorder %s463, %s465
      %p472 = scmp.eq.s32.totalorder %s43, 1
      %p473 = por %p471, %p472
      %p474 = scmp.ne.s32.totalorder %s465, %s466
      %p475 = scmp.eq.s32.totalorder %s43, 0
      %p476 = por %p474, %p475
      %p477 = scmp.ne.s32.totalorder %s465, %s466
      %p478 = scmp.eq.s32.totalorder %s44, 1
      %p479 = por %p477, %p478
      %p481 = scmp.ne.s32.totalorder %s466, %s480
      %p482 = scmp.eq.s32.totalorder %s44, 0
      %p483 = por %p481, %p482
      %s485 = sadd.s32 %s484, 1
      %p488 = scmp.eq.s32.totalorder %s38, 1
      %p489 = scmp.ne.s32.totalorder %s484, %s486
      %p490 = scmp.eq.s32.totalorder %s38, 0
      %p491 = por %p489, %p490
      %p492 = scmp.ne.s32.totalorder %s484, %s486
      %p493 = scmp.eq.s32.totalorder %s43, 1
      %p494 = por %p492, %p493
      %p495 = scmp.ne.s32.totalorder %s486, %s487
      %p496 = scmp.eq.s32.totalorder %s43, 0
      %p497 = por %p495, %p496
      %p498 = scmp.ne.s32.totalorder %s486, %s487
      %p499 = scmp.eq.s32.totalorder %s44, 1
      %p500 = por %p498, %p499
      %p502 = scmp.ne.s32.totalorder %s487, %s501
      %p503 = scmp.eq.s32.totalorder %s44, 0
      %p504 = por %p502, %p503
      %s506 = sadd.s32 %s505, 1
      %p509 = scmp.eq.s32.totalorder %s38, 1
      %p510 = scmp.ne.s32.totalorder %s505, %s507
      %p511 = scmp.eq.s32.totalorder %s38, 0
      %p512 = por %p510, %p511
      %p513 = scmp.ne.s32.totalorder %s505, %s507
      %p514 = scmp.eq.s32.totalorder %s43, 1
      %p515 = por %p513, %p514
      %p516 = scmp.ne.s32.totalorder %s507, %s508
      %p517 = scmp.eq.s32.totalorder %s43, 0
      %p518 = por %p516, %p517
      %p519 = scmp.ne.s32.totalorder %s507, %s508
      %p520 = scmp.eq.s32.totalorder %s44, 1
      %p521 = por %p519, %p520
      %p523 = scmp.ne.s32.totalorder %s508, %s522
      %p524 = scmp.eq.s32.totalorder %s44, 0
      %p525 = por %p523, %p524
      %s527 = sadd.s32 %s526, 1
      %p530 = scmp.eq.s32.totalorder %s38, 1
      %p531 = scmp.ne.s32.totalorder %s526, %s528
      %p532 = scmp.eq.s32.totalorder %s38, 0
      %p533 = por %p531, %p532
      %p534 = scmp.ne.s32.totalorder %s526, %s528
      %p535 = scmp.eq.s32.totalorder %s43, 1
      %p536 = por %p534, %p535
      %p537 = scmp.ne.s32.totalorder %s528, %s529
      %p538 = scmp.eq.s32.totalorder %s43, 0
      %p539 = por %p537, %p538
      %p540 = scmp.ne.s32.totalorder %s528, %s529
      %p541 = scmp.eq.s32.totalorder %s44, 1
      %p542 = por %p540, %p541
      %p544 = scmp.ne.s32.totalorder %s529, %s543
      %p545 = scmp.eq.s32.totalorder %s44, 0
      %p546 = por %p544, %p545
      %s548 = sadd.s32 %s547, 1
      %p551 = scmp.eq.s32.totalorder %s38, 1
      %p552 = scmp.ne.s32.totalorder %s547, %s549
      %p553 = scmp.eq.s32.totalorder %s38, 0
      %p554 = por %p552, %p553
      %p555 = scmp.ne.s32.totalorder %s547, %s549
      %p556 = scmp.eq.s32.totalorder %s43, 1
      %p557 = por %p555, %p556
      %p558 = scmp.ne.s32.totalorder %s549, %s550
      %p559 = scmp.eq.s32.totalorder %s43, 0
      %p560 = por %p558, %p559
      %p561 = scmp.ne.s32.totalorder %s549, %s550
      %p562 = scmp.eq.s32.totalorder %s44, 1
      %p563 = por %p561, %p562
      %p565 = scmp.ne.s32.totalorder %s550, %s564
      %p566 = scmp.eq.s32.totalorder %s44, 0
      %p567 = por %p565, %p566
      %s569 = sadd.s32 %s568, 1
      %p572 = scmp.eq.s32.totalorder %s38, 1
      %p573 = scmp.ne.s32.totalorder %s568, %s570
      %p574 = scmp.eq.s32.totalorder %s38, 0
      %p575 = por %p573, %p574
      %p576 = scmp.ne.s32.totalorder %s568, %s570
      %p577 = scmp.eq.s32.totalorder %s43, 1
      %p578 = por %p576, %p577
      %p579 = scmp.ne.s32.totalorder %s570, %s571
      %p580 = scmp.eq.s32.totalorder %s43, 0
      %p581 = por %p579, %p580
      %p582 = scmp.ne.s32.totalorder %s570, %s571
      %p583 = scmp.eq.s32.totalorder %s44, 1
      %p584 = por %p582, %p583
      %p586 = scmp.ne.s32.totalorder %s571, %s585
      %p587 = scmp.eq.s32.totalorder %s44, 0
      %p588 = por %p586, %p587
      %s589 = ssub.s32 %s38, %s45
      %p590 = scmp.eq.s32.totalorder %s589, 0
      %s592 = sadd.s32 %s591, 1
      %s593 = scalar_select %p590, %s591, %s592
      %p596 = pneg %p590
      %p597 = scmp.eq.s32.totalorder %s38, 1
      %p598 = por %p596, %p597
      %p599 = scmp.ne.s32.totalorder %s591, %s594
      %p600 = scmp.eq.s32.totalorder %s38, 0
      %p601 = por %p599, %p600
      %p602 = scmp.ne.s32.totalorder %s591, %s594
      %p603 = scmp.eq.s32.totalorder %s43, 1
      %p604 = por %p602, %p603
      %p605 = scmp.ne.s32.totalorder %s594, %s595
      %p606 = scmp.eq.s32.totalorder %s43, 0
      %p607 = por %p605, %p606
      %p608 = scmp.ne.s32.totalorder %s594, %s595
      %p609 = scmp.eq.s32.totalorder %s44, 1
      %p610 = por %p608, %p609
      %p612 = scmp.ne.s32.totalorder %s595, %s611
      %p613 = scmp.eq.s32.totalorder %s44, 0
      %p614 = por %p612, %p613
      %s615 = ssub.s32 %s38, %s45
      %p616 = scmp.eq.s32.totalorder %s615, 0
      %s618 = sadd.s32 %s617, 1
      %s619 = scalar_select %p616, %s617, %s618
      %p622 = pneg %p616
      %p623 = scmp.eq.s32.totalorder %s38, 1
      %p624 = por %p622, %p623
      %p625 = scmp.ne.s32.totalorder %s617, %s620
      %p626 = scmp.eq.s32.totalorder %s38, 0
      %p627 = por %p625, %p626
      %p628 = scmp.ne.s32.totalorder %s617, %s620
      %p629 = scmp.eq.s32.totalorder %s43, 1
      %p630 = por %p628, %p629
      %p631 = scmp.ne.s32.totalorder %s620, %s621
      %p632 = scmp.eq.s32.totalorder %s43, 0
      %p633 = por %p631, %p632
      %p634 = scmp.ne.s32.totalorder %s620, %s621
      %p635 = scmp.eq.s32.totalorder %s44, 1
      %p636 = por %p634, %p635
      %p638 = scmp.ne.s32.totalorder %s621, %s637
      %p639 = scmp.eq.s32.totalorder %s44, 0
      %p640 = por %p638, %p639
      %p641 = scmp.le.s32.totalorder 1, %s38
      %p642 = scmp.lt.s32.totalorder %s38, 3
      %p643 = pnand %p641, %p642
      %p644 = pneg %p643
      // Predicated region
      $region9: #{tinybert_forward.1} parent=5 // pred_check
        _
      $region10: #{tinybert_forward.1} parent=5 // pred_check_branch
        %646 = sbr.rel (%p643) target = $region12
      $region11: #{tinybert_forward.1} parent=5 // pred_region
        %s647 = ssub.s32 %s38, 1
        // Predicated region
        $region13: #{tinybert_forward.1} parent=11 // pred_check
          %p648 = pneg %p59
        $region14: #{tinybert_forward.1} parent=11 // pred_check_branch
          %650 = sbr.rel (%p648) target = $region16
        $region15: #{tinybert_forward.1} parent=11 // pred_region
          _
        $region16: #{tinybert_forward.1} parent=11 // pred_fallthru
          _
        // Predicated region
        $region17: #{tinybert_forward.1} parent=11 // pred_check
          %p651 = pneg %p80
        $region18: #{tinybert_forward.1} parent=11 // pred_check_branch
          %653 = sbr.rel (%p651) target = $region20
        $region19: #{tinybert_forward.1} parent=11 // pred_region
          _
        $region20: #{tinybert_forward.1} parent=11 // pred_fallthru
          _
        // Predicated region
        $region21: #{tinybert_forward.1} parent=11 // pred_check
          %p654 = pneg %p101
        $region22: #{tinybert_forward.1} parent=11 // pred_check_branch
          %656 = sbr.rel (%p654) target = $region24
        $region23: #{tinybert_forward.1} parent=11 // pred_region
          _
        $region24: #{tinybert_forward.1} parent=11 // pred_fallthru
          _
        // Predicated region
        $region25: #{tinybert_forward.1} parent=11 // pred_check
          %p657 = pneg %p434
        $region26: #{tinybert_forward.1} parent=11 // pred_check_branch
          %659 = sbr.rel (%p657) target = $region28
        $region27: #{tinybert_forward.1} parent=11 // pred_region
          _
        $region28: #{tinybert_forward.1} parent=11 // pred_fallthru
          _
        // Predicated region
        $region29: #{tinybert_forward.1} parent=11 // pred_check
          %p660 = pneg %p455
        $region30: #{tinybert_forward.1} parent=11 // pred_check_branch
          %662 = sbr.rel (%p660) target = $region32
        $region31: #{tinybert_forward.1} parent=11 // pred_region
          _
        $region32: #{tinybert_forward.1} parent=11 // pred_fallthru
          _
        // Predicated region
        $region33: #{tinybert_forward.1} parent=11 // pred_check
          %p663 = pneg %p476
        $region34: #{tinybert_forward.1} parent=11 // pred_check_branch
          %665 = sbr.rel (%p663) target = $region36
        $region35: #{tinybert_forward.1} parent=11 // pred_region
          _
        $region36: #{tinybert_forward.1} parent=11 // pred_fallthru
          _
        // Predicated region
        $region37: #{tinybert_forward.1} parent=11 // pred_check
          %p666 = pneg %p497
        $region38: #{tinybert_forward.1} parent=11 // pred_check_branch
          %668 = sbr.rel (%p666) target = $region40
        $region39: #{tinybert_forward.1} parent=11 // pred_region
          _
        $region40: #{tinybert_forward.1} parent=11 // pred_fallthru
          _
        // Predicated region
        $region41: #{tinybert_forward.1} parent=11 // pred_check
          %p669 = pneg %p518
        $region42: #{tinybert_forward.1} parent=11 // pred_check_branch
          %671 = sbr.rel (%p669) target = $region44
        $region43: #{tinybert_forward.1} parent=11 // pred_region
          _
        $region44: #{tinybert_forward.1} parent=11 // pred_fallthru
          _
        // Predicated region
        $region45: #{tinybert_forward.1} parent=11 // pred_check
          %p672 = pneg %p539
        $region46: #{tinybert_forward.1} parent=11 // pred_check_branch
          %674 = sbr.rel (%p672) target = $region48
        $region47: #{tinybert_forward.1} parent=11 // pred_region
          _
        $region48: #{tinybert_forward.1} parent=11 // pred_fallthru
          _
      $region12: #{tinybert_forward.1} parent=5 // pred_fallthru
        _
      %p675 = scmp.lt.s32.totalorder %s38, 2
      // Predicated region
      $region49: #{tinybert_forward.1} parent=5 // pred_check
        %p676 = pneg %p675
      $region50: #{tinybert_forward.1} parent=5 // pred_check_branch
        %678 = sbr.rel (%p676) target = $region52
      $region51: #{tinybert_forward.1} parent=5 // pred_region
        // Predicated region
        $region53: #{tinybert_forward.1} parent=51 // pred_check
          %p679 = pneg %p121
        $region54: #{tinybert_forward.1} parent=51 // pred_check_branch
          %681 = sbr.rel (%p679) target = $region56
        $region55: #{tinybert_forward.1} parent=51 // pred_region
          %s682 = sand.u32 %s111, 1
          %s683 = scalar_lea.sflag [#allocation4], %s682
          %s684 = sand.u32 %s111, 1
          %s685 = smul.addr %s684, 32
          %s686 = scalar_lea.vmem [#allocation3], %s685
          %688 = vsyncadd %s683, 0
          %s689 = smul.addr %s38, 4
          %s690 = smul.addr %s689, 8
          %s691 = scalar_lea.hbm %s3, %s690
          %s692 = sshll.u32 %s691, 4
          %s693 = int_to_ptr.hbm [resolvable:$true] %s692
          %s694 = sshll.u32 %s686, 4
          %s695 = int_to_ptr.vmem [resolvable:$true] %s694
          %700 = dma.hbm_to_vmem [thread:$0]  %s693, 512, %s695, %s683, 128, 128, 8
        $region56: #{tinybert_forward.1} parent=51 // pred_fallthru
          _
        // Predicated region
        $region57: #{tinybert_forward.1} parent=51 // pred_check
          %p701 = pneg %p147
        $region58: #{tinybert_forward.1} parent=51 // pred_check_branch
          %703 = sbr.rel (%p701) target = $region60
        $region59: #{tinybert_forward.1} parent=51 // pred_region
          %p704 = scmp.lt.s32.totalorder %s38, 1
          %s705 = scalar_select %p704, %s38, 1
          %s706 = scalar_lea.vmem %s4, %s705
        $region60: #{tinybert_forward.1} parent=51 // pred_fallthru
          _
        // Predicated region
        $region61: #{tinybert_forward.1} parent=51 // pred_check
          %p707 = pneg %p173
        $region62: #{tinybert_forward.1} parent=51 // pred_check_branch
          %709 = sbr.rel (%p707) target = $region64
        $region63: #{tinybert_forward.1} parent=51 // pred_region
          %s710 = sand.u32 %s38, 1
          %s711 = scalar_lea.sflag [#allocation7], %s710
          %s712 = sand.u32 %s163, 1
          %s713 = smul.addr %s712, 32
          %s714 = scalar_lea.vmem [#allocation6], %s713
          %716 = vsyncadd %s711, 0
          %s717 = smul.addr %s38, 4
          %s718 = smul.addr %s717, 8
          %s719 = scalar_lea.hbm %s5, %s718
          %s720 = sshll.u32 %s719, 4
          %s721 = int_to_ptr.hbm [resolvable:$true] %s720
          %s722 = sshll.u32 %s714, 4
          %s723 = int_to_ptr.vmem [resolvable:$true] %s722
          %728 = dma.hbm_to_vmem [thread:$0]  %s721, 512, %s723, %s711, 128, 128, 8
        $region64: #{tinybert_forward.1} parent=51 // pred_fallthru
          _
        // Predicated region
        $region65: #{tinybert_forward.1} parent=51 // pred_check
          %p729 = pneg %p199
        $region66: #{tinybert_forward.1} parent=51 // pred_check_branch
          %731 = sbr.rel (%p729) target = $region68
        $region67: #{tinybert_forward.1} parent=51 // pred_region
          %p732 = scmp.lt.s32.totalorder %s38, 1
          %s733 = scalar_select %p732, %s38, 1
          %s734 = scalar_lea.vmem %s6, %s733
        $region68: #{tinybert_forward.1} parent=51 // pred_fallthru
          _
        // Predicated region
        $region69: #{tinybert_forward.1} parent=51 // pred_check
          %p735 = pneg %p225
        $region70: #{tinybert_forward.1} parent=51 // pred_check_branch
          %737 = sbr.rel (%p735) target = $region72
        $region71: #{tinybert_forward.1} parent=51 // pred_region
          %p738 = scmp.lt.s32.totalorder %s38, 1
          %s739 = scalar_select %p738, %s38, 1
          %s740 = scalar_lea.vmem %s7, %s739
        $region72: #{tinybert_forward.1} parent=51 // pred_fallthru
          _
        // Predicated region
        $region73: #{tinybert_forward.1} parent=51 // pred_check
          %p741 = pneg %p251
        $region74: #{tinybert_forward.1} parent=51 // pred_check_branch
          %743 = sbr.rel (%p741) target = $region76
        $region75: #{tinybert_forward.1} parent=51 // pred_region
          %p744 = scmp.lt.s32.totalorder %s38, 1
          %s745 = scalar_select %p744, %s38, 1
          %s746 = scalar_lea.vmem %s8, %s745
        $region76: #{tinybert_forward.1} parent=51 // pred_fallthru
          _
        // Predicated region
        $region77: #{tinybert_forward.1} parent=51 // pred_check
          %p747 = pneg %p277
        $region78: #{tinybert_forward.1} parent=51 // pred_check_branch
          %749 = sbr.rel (%p747) target = $region80
        $region79: #{tinybert_forward.1} parent=51 // pred_region
          %s750 = sand.u32 %s38, 1
          %s751 = scalar_lea.sflag [#allocation7], %s750
          %s752 = sand.u32 %s267, 1
          %s753 = smul.addr %s752, 32
          %s754 = scalar_lea.vmem [#allocation8], %s753
          %756 = vsyncadd %s751, 0
          %s757 = smul.addr %s38, 4
          %s758 = smul.addr %s757, 8
          %s759 = scalar_lea.hbm %s9, %s758
          %s760 = sshll.u32 %s759, 4
          %s761 = int_to_ptr.hbm [resolvable:$true] %s760
          %s762 = sshll.u32 %s754, 4
          %s763 = int_to_ptr.vmem [resolvable:$true] %s762
          %768 = dma.hbm_to_vmem [thread:$0]  %s761, 512, %s763, %s751, 128, 128, 8
        $region80: #{tinybert_forward.1} parent=51 // pred_fallthru
          _
        // Predicated region
        $region81: #{tinybert_forward.1} parent=51 // pred_check
          %p769 = pneg %p303
        $region82: #{tinybert_forward.1} parent=51 // pred_check_branch
          %771 = sbr.rel (%p769) target = $region84
        $region83: #{tinybert_forward.1} parent=51 // pred_region
          %p772 = scmp.lt.s32.totalorder %s38, 1
          %s773 = scalar_select %p772, %s38, 1
          %s774 = scalar_lea.vmem %s10, %s773
        $region84: #{tinybert_forward.1} parent=51 // pred_fallthru
          _
        // Predicated region
        $region85: #{tinybert_forward.1} parent=51 // pred_check
          %p775 = pneg %p329
        $region86: #{tinybert_forward.1} parent=51 // pred_check_branch
          %777 = sbr.rel (%p775) target = $region88
        $region87: #{tinybert_forward.1} parent=51 // pred_region
          %p778 = scmp.lt.s32.totalorder %s38, 1
          %s779 = scalar_select %p778, %s38, 1
          %s780 = smul.addr %s779, 8
          %s781 = smul.addr %s780, 8
          %s782 = scalar_lea.vmem %s11, %s781
        $region88: #{tinybert_forward.1} parent=51 // pred_fallthru
          _
        // Predicated region
        $region89: #{tinybert_forward.1} parent=51 // pred_check
          %p783 = pneg %p355
        $region90: #{tinybert_forward.1} parent=51 // pred_check_branch
          %785 = sbr.rel (%p783) target = $region92
        $region91: #{tinybert_forward.1} parent=51 // pred_region
          %p786 = scmp.lt.s32.totalorder %s38, 1
          %s787 = scalar_select %p786, %s38, 1
          %s788 = scalar_lea.vmem %s12, %s787
        $region92: #{tinybert_forward.1} parent=51 // pred_fallthru
          _
        // Predicated region
        $region93: #{tinybert_forward.1} parent=51 // pred_check
          %p789 = pneg %p381
        $region94: #{tinybert_forward.1} parent=51 // pred_check_branch
          %791 = sbr.rel (%p789) target = $region96
        $region95: #{tinybert_forward.1} parent=51 // pred_region
          %p792 = scmp.lt.s32.totalorder %s38, 1
          %s793 = scalar_select %p792, %s38, 1
          %s794 = scalar_lea.vmem %s13, %s793
        $region96: #{tinybert_forward.1} parent=51 // pred_fallthru
          _
        // Predicated region
        $region97: #{tinybert_forward.1} parent=51 // pred_check
          %p795 = pneg %p407
        $region98: #{tinybert_forward.1} parent=51 // pred_check_branch
          %797 = sbr.rel (%p795) target = $region100
        $region99: #{tinybert_forward.1} parent=51 // pred_region
          %p798 = scmp.lt.s32.totalorder %s38, 1
          %s799 = scalar_select %p798, %s38, 1
          %s800 = scalar_lea.vmem %s14, %s799
        $region100: #{tinybert_forward.1} parent=51 // pred_fallthru
          _
      $region52: #{tinybert_forward.1} parent=5 // pred_fallthru
        _
      %p801 = scmp.le.s32.totalorder 1, %s38
      %p802 = scmp.lt.s32.totalorder %s38, 3
      %p803 = pnand %p801, %p802
      %p804 = pneg %p803
      // Predicated region
      $region101: #{tinybert_forward.1} parent=5 // pred_check
        _
      $region102: #{tinybert_forward.1} parent=5 // pred_check_branch
        %806 = sbr.rel (%p803) target = $region104
      $region103: #{tinybert_forward.1} parent=5 // pred_region
        %s807 = ssub.s32 %s38, 1
        %s808 = sand.u32 %s114, 1
        %s809 = scalar_lea.sflag [#allocation4], %s808
        %s810 = sand.u32 %s114, 1
        %s811 = smul.addr %s810, 32
        %s812 = scalar_lea.vmem [#allocation3], %s811
        // Predicated region
        $region105: #{tinybert_forward.1} parent=103 // pred_check
          %p813 = pneg %p127
        $region106: #{tinybert_forward.1} parent=103 // pred_check_branch
          %815 = sbr.rel (%p813) target = $region108
        $region107: #{tinybert_forward.1} parent=103 // pred_region
          %817 = dma.done %s809, 512
        $region108: #{tinybert_forward.1} parent=103 // pred_fallthru
          _
        %s818 = sand.u32 %s43, 1
        %s819 = scalar_lea.sflag [#allocation7], %s818
        %s820 = sand.u32 %s166, 1
        %s821 = smul.addr %s820, 32
        %s822 = scalar_lea.vmem [#allocation6], %s821
        // Predicated region
        $region109: #{tinybert_forward.1} parent=103 // pred_check
          %p823 = pneg %p179
        $region110: #{tinybert_forward.1} parent=103 // pred_check_branch
          %825 = sbr.rel (%p823) target = $region112
        $region111: #{tinybert_forward.1} parent=103 // pred_region
          %827 = dma.done %s819, 512
        $region112: #{tinybert_forward.1} parent=103 // pred_fallthru
          _
        %s828 = sand.u32 %s43, 1
        %s829 = scalar_lea.sflag [#allocation7], %s828
        %s830 = sand.u32 %s270, 1
        %s831 = smul.addr %s830, 32
        %s832 = scalar_lea.vmem [#allocation8], %s831
        // Predicated region
        $region113: #{tinybert_forward.1} parent=103 // pred_check
          %p833 = pneg %p283
        $region114: #{tinybert_forward.1} parent=103 // pred_check_branch
          %835 = sbr.rel (%p833) target = $region116
        $region115: #{tinybert_forward.1} parent=103 // pred_region
          %837 = dma.done %s829, 512
        $region116: #{tinybert_forward.1} parent=103 // pred_fallthru
          _
        %p838 = pneg %p59
        %p839 = pneg %p56
        %p840 = pneg %p80
        %p841 = pneg %p77
        %p842 = pneg %p101
        %p843 = pneg %p98
        %s844 = sand.u32 %s114, 1
        %s845 = scalar_lea.sflag [#allocation4], %s844
        %s846 = sand.u32 %s114, 1
        %s847 = smul.addr %s846, 32
        %s848 = scalar_lea.vmem [#allocation3], %s847
        %p849 = pneg %p127
        %p850 = pneg %p124
        %p851 = scmp.lt.s32.totalorder %s43, 1
        %s852 = scalar_select %p851, %s43, 1
        %s853 = scalar_lea.vmem %s4, %s852
        %p854 = pneg %p153
        %p855 = pneg %p150
        %s856 = sand.u32 %s43, 1
        %s857 = scalar_lea.sflag [#allocation7], %s856
        %s858 = sand.u32 %s166, 1
        %s859 = smul.addr %s858, 32
        %s860 = scalar_lea.vmem [#allocation6], %s859
        %p861 = pneg %p179
        %p862 = pneg %p176
        %p863 = scmp.lt.s32.totalorder %s43, 1
        %s864 = scalar_select %p863, %s43, 1
        %s865 = scalar_lea.vmem %s6, %s864
        %p866 = pneg %p205
        %p867 = pneg %p202
        %p868 = scmp.lt.s32.totalorder %s43, 1
        %s869 = scalar_select %p868, %s43, 1
        %s870 = scalar_lea.vmem %s7, %s869
        %p871 = pneg %p231
        %p872 = pneg %p228
        %p873 = scmp.lt.s32.totalorder %s43, 1
        %s874 = scalar_select %p873, %s43, 1
        %s875 = scalar_lea.vmem %s8, %s874
        %p876 = pneg %p257
        %p877 = pneg %p254
        %s878 = sand.u32 %s43, 1
        %s879 = scalar_lea.sflag [#allocation7], %s878
        %s880 = sand.u32 %s270, 1
        %s881 = smul.addr %s880, 32
        %s882 = scalar_lea.vmem [#allocation8], %s881
        %p883 = pneg %p283
        %p884 = pneg %p280
        %p885 = scmp.lt.s32.totalorder %s43, 1
        %s886 = scalar_select %p885, %s43, 1
        %s887 = scalar_lea.vmem %s10, %s886
        %p888 = pneg %p309
        %p889 = pneg %p306
        %p890 = scmp.lt.s32.totalorder %s43, 1
        %s891 = scalar_select %p890, %s43, 1
        %s892 = smul.addr %s891, 8
        %s893 = smul.addr %s892, 8
        %s894 = scalar_lea.vmem %s11, %s893
        %p895 = pneg %p335
        %p896 = pneg %p332
        %p897 = scmp.lt.s32.totalorder %s43, 1
        %s898 = scalar_select %p897, %s43, 1
        %s899 = scalar_lea.vmem %s12, %s898
        %p900 = pneg %p361
        %p901 = pneg %p358
        %p902 = scmp.lt.s32.totalorder %s43, 1
        %s903 = scalar_select %p902, %s43, 1
        %s904 = scalar_lea.vmem %s13, %s903
        %p905 = pneg %p387
        %p906 = pneg %p384
        %p907 = scmp.lt.s32.totalorder %s43, 1
        %s908 = scalar_select %p907, %s43, 1
        %s909 = scalar_lea.vmem %s14, %s908
        %p910 = pneg %p413
        %p911 = pneg %p410
        %p912 = pneg %p434
        %p913 = pneg %p431
        %p914 = pneg %p455
        %p915 = pneg %p452
        %p916 = pneg %p476
        %p917 = pneg %p473
        %p918 = pneg %p497
        %p919 = pneg %p494
        %p920 = pneg %p518
        %p921 = pneg %p515
        %p922 = pneg %p539
        %p923 = pneg %p536
        %p924 = pneg %p560
        %p925 = pneg %p557
        %p926 = pneg %p581
        %p927 = pneg %p578
        %p928 = pneg %p607
        %p929 = pneg %p604
        %p930 = scmp.lt.s32.totalorder %s43, 1
        %s931 = scalar_select %p930, %s43, 1
        %s932 = smul.addr %s931, 12
        %s933 = smul.addr %s932, 8
        %s934 = scalar_lea.vmem %s23, %s933
        %p935 = pneg %p633
        %p936 = pneg %p630
        %p937 = scmp.lt.s32.totalorder %s43, 1
        %s938 = scalar_select %p937, %s43, 1
        %s939 = smul.addr %s938, 4
        %s940 = smul.addr %s939, 8
        %s941 = scalar_lea.vmem %s24, %s940
        %p942 = scmp.lt.s32.totalorder %s43, 1
        %s943 = scalar_select %p942, %s43, 1
        %s944 = scalar_lea.vmem %s4, %s943
        %p945 = scmp.lt.s32.totalorder %s43, 1
        %s946 = scalar_select %p945, %s43, 1
        %s947 = scalar_lea.vmem %s6, %s946
        %p948 = scmp.lt.s32.totalorder %s43, 1
        %s949 = scalar_select %p948, %s43, 1
        %s950 = scalar_lea.vmem %s7, %s949
        %p951 = scmp.lt.s32.totalorder %s43, 1
        %s952 = scalar_select %p951, %s43, 1
        %s953 = scalar_lea.vmem %s8, %s952
        %p954 = scmp.lt.s32.totalorder %s43, 1
        %s955 = scalar_select %p954, %s43, 1
        %s956 = scalar_lea.vmem %s10, %s955
        %p957 = scmp.lt.s32.totalorder %s43, 1
        %s958 = scalar_select %p957, %s43, 1
        %s959 = smul.addr %s958, 8
        %s960 = smul.addr %s959, 8
        %s961 = scalar_lea.vmem %s11, %s960
        %p962 = scmp.lt.s32.totalorder %s43, 1
        %s963 = scalar_select %p962, %s43, 1
        %s964 = scalar_lea.vmem %s12, %s963
        %p965 = scmp.lt.s32.totalorder %s43, 1
        %s966 = scalar_select %p965, %s43, 1
        %s967 = scalar_lea.vmem %s13, %s966
        %p968 = scmp.lt.s32.totalorder %s43, 1
        %s969 = scalar_select %p968, %s43, 1
        %s970 = scalar_lea.vmem %s14, %s969
        %p971 = scmp.lt.s32.totalorder %s43, 1
        %s972 = scalar_select %p971, %s43, 1
        %s973 = smul.addr %s972, 12
        %s974 = smul.addr %s973, 8
        %s975 = scalar_lea.vmem %s23, %s974
        %p976 = scmp.lt.s32.totalorder %s43, 1
        %s977 = scalar_select %p976, %s43, 1
        %s978 = smul.addr %s977, 4
        %s979 = smul.addr %s978, 8
        %s980 = scalar_lea.vmem %s24, %s979
        %p981 = scmp.eq.s32.totalorder %s43, 0
        // Predicated region
        $region117: #{tinybert_forward.1} parent=103 // pred_check
          %p982 = pneg %p981
        $region118: #{tinybert_forward.1} parent=103 // pred_check_branch
          %984 = sbr.rel (%p982) target = $region120
        $region119: #{tinybert_forward.1} parent=103 // pred_region
          %v985 = vld [vmem:[%s0] sm:$0xff]
          %v986 = vld [vmem:[%s0 + $0x8] sm:$0xff]
          %v987 = vld [vmem:[%s1] sm:$0x1]
          %v988 = vld [vmem:[%s2] sm:$0x1]
          %vm989 = vcmask 261120
          %v990 = vsel %vm989, %v985, 0.0
          %991 = vadd.xlane.f32.xlu0 %v990
          %v992 = vpop.xlane.xlu0 %991
          %v993 = vsel %vm989, %v986, 0.0
          %994 = vadd.xlane.f32.xlu0 %v993
          %v995 = vpop.xlane.xlu0 %994
          %v996 = vrcp.pop 32.0
          %v997 = vmul.f32 32.0, %v996
          %v998 = vsub.f32 1.0, %v997
          %v999 = vmul.f32 %v996, %v998
          %v1000 = vadd.f32 %v996, %v999
          %vm1001 = vweird.f32 %v996
          %v1002 = vsel %vm1001, %v996, %v1000
          %v1003 = vmul.f32 %v992, %v1002
          %v1004 = vmul.f32 %v995, %v1002
          %v1005 = vsub.f32 %v985, %v1003
          %v1006 = vsub.f32 %v986, %v1004
          %v1007 = vmul.f32 %v1005, %v1005
          %v1008 = vmul.f32 %v1006, %v1006
          %v1009 = vsel %vm989, %v1007, 0.0
          %1010 = vadd.xlane.f32.xlu0 %v1009
          %v1011 = vpop.xlane.xlu0 %1010
          %v1012 = vsel %vm989, %v1008, 0.0
          %1013 = vadd.xlane.f32.xlu0 %v1012
          %v1014 = vpop.xlane.xlu0 %1013
          %v1015 = vmul.f32 %v1011, %v1002
          %v1016 = vmul.f32 %v1014, %v1002
          %v1017 = vadd.f32 %v1015, 1e-12
          %v1018 = vadd.f32 %v1016, 1e-12
          %v1019 = vrsqrt.pop %v1017
          %v1020 = vmul.f32 %v1019, %v1017
          %v1021 = vmul.f32 %v1020, %v1019
          %v1022 = vmul.f32 0.5, %v1021
          %v1023 = vsub.f32 1.5, %v1022
          %v1024 = vmul.f32 %v1019, %v1023
          %vm1025 = vweird.f32 %v1017
          %vm1026 = vweird.f32 %v1019
          %vm1027 = vmor %vm1025, %vm1026
          %v1028 = vsel %vm1027, %v1019, %v1024
          %v1029 = vrsqrt.pop %v1018
          %v1030 = vmul.f32 %v1029, %v1018
          %v1031 = vmul.f32 %v1030, %v1029
          %v1032 = vmul.f32 0.5, %v1031
          %v1033 = vsub.f32 1.5, %v1032
          %v1034 = vmul.f32 %v1029, %v1033
          %vm1035 = vweird.f32 %v1018
          %vm1036 = vweird.f32 %v1029
          %vm1037 = vmor %vm1035, %vm1036
          %v1038 = vsel %vm1037, %v1029, %v1034
          %v1039 = vmul.f32 %v1005, %v1028
          %v1040 = vmul.f32 %v1006, %v1038
          %v1042 = vperm.slane %v987, 0
          %v1044 = vmul.f32 %v1039, %v1042
          %v1045 = vmul.f32 %v1040, %v1042
          %v1047 = vperm.slane %v988, 0
          %v1049 = vadd.f32 %v1044, %v1047
          %v1050 = vadd.f32 %v1045, %v1047
          %1051 = vst.msk [vmem:[#allocation2] sm:$0xff] %vm989, %v1049
          %1052 = vst.msk [vmem:[#allocation2 + $0x8] sm:$0xff] %vm989, %v1050
          %v1053 = vld [vmem:[%s17] sm:$0xff]
          %v1054 = vld [vmem:[%s17 + $0x8] sm:$0xff]
          %v1055 = vld [vmem:[%s17 + $0x10] sm:$0xff]
          %v1056 = vld [vmem:[%s17 + $0x18] sm:$0xff]
          %v1057 = vld [vmem:[%s17 + $0x20] sm:$0xff]
          %v1058 = vld [vmem:[%s17 + $0x28] sm:$0xff]
          %v1059 = vld [vmem:[%s17 + $0x30] sm:$0xff]
          %v1060 = vld [vmem:[%s17 + $0x38] sm:$0xff]
          %v1061 = vld [vmem:[%s17 + $0x40] sm:$0xff]
          %v1062 = vld [vmem:[%s17 + $0x48] sm:$0xff]
          %v1063 = vld [vmem:[%s17 + $0x50] sm:$0xff]
          %v1064 = vld [vmem:[%s17 + $0x58] sm:$0xff]
          %v1065 = vld [vmem:[%s17 + $0x60] sm:$0xff]
          %v1066 = vld [vmem:[%s17 + $0x68] sm:$0xff]
          %v1067 = vld [vmem:[%s17 + $0x70] sm:$0xff]
          %v1068 = vld [vmem:[%s17 + $0x78] sm:$0xff]
          %v1069 = vld [vmem:[%s17 + $0x80] sm:$0xff]
          %v1070 = vld [vmem:[%s17 + $0x88] sm:$0xff]
          %v1071 = vld [vmem:[%s17 + $0x90] sm:$0xff]
          %v1072 = vld [vmem:[%s17 + $0x98] sm:$0xff]
          %v1073 = vld [vmem:[%s17 + $0xa0] sm:$0xff]
          %v1074 = vld [vmem:[%s17 + $0xa8] sm:$0xff]
          %v1075 = vld [vmem:[%s17 + $0xb0] sm:$0xff]
          %v1076 = vld [vmem:[%s17 + $0xb8] sm:$0xff]
          %v1077 = vld [vmem:[%s18] sm:$0x3f]
          %v1079 = vperm.slane %v1077, 0
          %v1080 = vperm.slane %v1077, 1
          %v1081 = vperm.slane %v1077, 2
          %v1082 = vperm.slane %v1077, 3
          %v1083 = vperm.slane %v1077, 4
          %v1084 = vperm.slane %v1077, 5
          %v1092 = vsel %vm989, %v1049, 0
          %v1095 = vsel %vm989, %v1050, 0
          %1097 = vmatpush.msra.mxu0 0.0
          %1098 = vmatpush.msra.mxu0 0.0
          %1099 = vmatpush.msra.mxu0 0.0
          %1100 = vmatpush.msra.mxu0 0.0
          %1101 = vmatpush.msra.mxu0 0.0
          %1102 = vmatpush.msra.mxu0 0.0
          %1103 = vmatpush.msra.mxu0 0.0
          %1104 = vmatpush.msra.mxu0 0.0
          %1105 = vmatpush.msra.mxu0 0.0
          %1106 = vmatpush.msra.mxu0 0.0
          %1107 = vmatpush.msra.mxu0 0.0
          %1108 = vmatpush.msra.mxu0 0.0
          %1109 = vmatpush.msra.mxu0 %v1071
          %1110 = vmatpush.msra.mxu0 %v1065
          %1111 = vmatpush.msra.mxu0 %v1059
          %1112 = vmatpush.msra.mxu0 %v1053
          %1113 = vmatmul.f32.gmra.mxu0 %v1092
          %v1114 = vpop.f32.mrf.mxu0
          %v1115 = vadd.f32 %v1079, %v1114
          %1116 = vmatmul.f32.gmra.mxu0 %v1095
          %v1117 = vpop.f32.mrf.mxu0
          %v1118 = vadd.f32 %v1079, %v1117
          %1119 = vdwg.mxu0
          %1120 = vmatpush.msra.mxu0 0.0
          %1121 = vmatpush.msra.mxu0 0.0
          %1122 = vmatpush.msra.mxu0 0.0
          %1123 = vmatpush.msra.mxu0 0.0
          %1124 = vmatpush.msra.mxu0 0.0
          %1125 = vmatpush.msra.mxu0 0.0
          %1126 = vmatpush.msra.mxu0 0.0
          %1127 = vmatpush.msra.mxu0 0.0
          %1128 = vmatpush.msra.mxu0 0.0
          %1129 = vmatpush.msra.mxu0 0.0
          %1130 = vmatpush.msra.mxu0 0.0
          %1131 = vmatpush.msra.mxu0 0.0
          %1132 = vmatpush.msra.mxu0 %v1072
          %1133 = vmatpush.msra.mxu0 %v1066
          %1134 = vmatpush.msra.mxu0 %v1060
          %1135 = vmatpush.msra.mxu0 %v1054
          %1136 = vmatmul.f32.gmra.mxu0 %v1092
          %v1137 = vpop.f32.mrf.mxu0
          %v1138 = vadd.f32 %v1080, %v1137
          %1139 = vmatmul.f32.gmra.mxu0 %v1095
          %v1140 = vpop.f32.mrf.mxu0
          %v1141 = vadd.f32 %v1080, %v1140
          %1142 = vdwg.mxu0
          %1143 = vmatpush.msra.mxu0 0.0
          %1144 = vmatpush.msra.mxu0 0.0
          %1145 = vmatpush.msra.mxu0 0.0
          %1146 = vmatpush.msra.mxu0 0.0
          %1147 = vmatpush.msra.mxu0 0.0
          %1148 = vmatpush.msra.mxu0 0.0
          %1149 = vmatpush.msra.mxu0 0.0
          %1150 = vmatpush.msra.mxu0 0.0
          %1151 = vmatpush.msra.mxu0 0.0
          %1152 = vmatpush.msra.mxu0 0.0
          %1153 = vmatpush.msra.mxu0 0.0
          %1154 = vmatpush.msra.mxu0 0.0
          %1155 = vmatpush.msra.mxu0 %v1073
          %1156 = vmatpush.msra.mxu0 %v1067
          %1157 = vmatpush.msra.mxu0 %v1061
          %1158 = vmatpush.msra.mxu0 %v1055
          %1159 = vmatmul.f32.gmra.mxu0 %v1092
          %v1160 = vpop.f32.mrf.mxu0
          %v1161 = vadd.f32 %v1081, %v1160
          %1162 = vmatmul.f32.gmra.mxu0 %v1095
          %v1163 = vpop.f32.mrf.mxu0
          %v1164 = vadd.f32 %v1081, %v1163
          %1165 = vdwg.mxu0
          %1166 = vmatpush.msra.mxu0 0.0
          %1167 = vmatpush.msra.mxu0 0.0
          %1168 = vmatpush.msra.mxu0 0.0
          %1169 = vmatpush.msra.mxu0 0.0
          %1170 = vmatpush.msra.mxu0 0.0
          %1171 = vmatpush.msra.mxu0 0.0
          %1172 = vmatpush.msra.mxu0 0.0
          %1173 = vmatpush.msra.mxu0 0.0
          %1174 = vmatpush.msra.mxu0 0.0
          %1175 = vmatpush.msra.mxu0 0.0
          %1176 = vmatpush.msra.mxu0 0.0
          %1177 = vmatpush.msra.mxu0 0.0
          %1178 = vmatpush.msra.mxu0 %v1074
          %1179 = vmatpush.msra.mxu0 %v1068
          %1180 = vmatpush.msra.mxu0 %v1062
          %1181 = vmatpush.msra.mxu0 %v1056
          %1182 = vmatmul.f32.gmra.mxu0 %v1092
          %v1183 = vpop.f32.mrf.mxu0
          %v1184 = vadd.f32 %v1082, %v1183
          %1185 = vmatmul.f32.gmra.mxu0 %v1095
          %v1186 = vpop.f32.mrf.mxu0
          %v1187 = vadd.f32 %v1082, %v1186
          %1188 = vdwg.mxu0
          %1189 = vmatpush.msra.mxu0 0.0
          %1190 = vmatpush.msra.mxu0 0.0
          %1191 = vmatpush.msra.mxu0 0.0
          %1192 = vmatpush.msra.mxu0 0.0
          %1193 = vmatpush.msra.mxu0 0.0
          %1194 = vmatpush.msra.mxu0 0.0
          %1195 = vmatpush.msra.mxu0 0.0
          %1196 = vmatpush.msra.mxu0 0.0
          %1197 = vmatpush.msra.mxu0 0.0
          %1198 = vmatpush.msra.mxu0 0.0
          %1199 = vmatpush.msra.mxu0 0.0
          %1200 = vmatpush.msra.mxu0 0.0
          %1201 = vmatpush.msra.mxu0 %v1075
          %1202 = vmatpush.msra.mxu0 %v1069
          %1203 = vmatpush.msra.mxu0 %v1063
          %1204 = vmatpush.msra.mxu0 %v1057
          %1205 = vmatmul.f32.gmra.mxu0 %v1092
          %v1206 = vpop.f32.mrf.mxu0
          %v1207 = vadd.f32 %v1083, %v1206
          %1208 = vmatmul.f32.gmra.mxu0 %v1095
          %v1209 = vpop.f32.mrf.mxu0
          %v1210 = vadd.f32 %v1083, %v1209
          %1211 = vdwg.mxu0
          %1212 = vmatpush.msra.mxu0 0.0
          %1213 = vmatpush.msra.mxu0 0.0
          %1214 = vmatpush.msra.mxu0 0.0
          %1215 = vmatpush.msra.mxu0 0.0
          %1216 = vmatpush.msra.mxu0 0.0
          %1217 = vmatpush.msra.mxu0 0.0
          %1218 = vmatpush.msra.mxu0 0.0
          %1219 = vmatpush.msra.mxu0 0.0
          %1220 = vmatpush.msra.mxu0 0.0
          %1221 = vmatpush.msra.mxu0 0.0
          %1222 = vmatpush.msra.mxu0 0.0
          %1223 = vmatpush.msra.mxu0 0.0
          %1224 = vmatpush.msra.mxu0 %v1076
          %1225 = vmatpush.msra.mxu0 %v1070
          %1226 = vmatpush.msra.mxu0 %v1064
          %1227 = vmatpush.msra.mxu0 %v1058
          %1228 = vmatmul.f32.gmra.mxu0 %v1092
          %v1229 = vpop.f32.mrf.mxu0
          %v1230 = vadd.f32 %v1084, %v1229
          %1231 = vmatmul.f32.gmra.mxu0 %v1095
          %v1232 = vpop.f32.mrf.mxu0
          %v1233 = vadd.f32 %v1084, %v1232
          %1234 = vdwg.mxu0
          %1235 = vst [vmem:[#allocation9] sm:$0xff] %v1115
          %1236 = vst [vmem:[#allocation9 + $0x8] sm:$0xff] %v1138
          %1237 = vst [vmem:[#allocation9 + $0x10] sm:$0xff] %v1161
          %1238 = vst [vmem:[#allocation9 + $0x18] sm:$0xff] %v1184
          %1239 = vst [vmem:[#allocation9 + $0x20] sm:$0xff] %v1207
          %1240 = vst [vmem:[#allocation9 + $0x28] sm:$0xff] %v1230
          %1241 = vst [vmem:[#allocation9 + $0x30] sm:$0xff] %v1118
          %1242 = vst [vmem:[#allocation9 + $0x38] sm:$0xff] %v1141
          %1243 = vst [vmem:[#allocation9 + $0x40] sm:$0xff] %v1164
          %1244 = vst [vmem:[#allocation9 + $0x48] sm:$0xff] %v1187
          %1245 = vst [vmem:[#allocation9 + $0x50] sm:$0xff] %v1210
          %1246 = vst [vmem:[#allocation9 + $0x58] sm:$0xff] %v1233
        $region120: #{tinybert_forward.1} parent=103 // pred_fallthru
          _
        %v1247 = vld [vmem:[#allocation2] sm:$0xff]
        %v1248 = vld [vmem:[#allocation2 + $0x8] sm:$0xff]
        %v1249 = vld [vmem:[%s812] sm:$0xff]
        %v1250 = vld [vmem:[%s812 + $0x8] sm:$0xff]
        %v1251 = vld [vmem:[%s812 + $0x10] sm:$0xff]
        %v1252 = vld [vmem:[%s812 + $0x18] sm:$0xff]
        %v1253 = vld [vmem:[%s944] sm:$0x1]
        %v1255 = vperm.slane %v1253, 0
        %vm1257 = vcmask 261120
        %v1259 = vsel %vm1257, %v1247, 0
        %v1262 = vsel %vm1257, %v1248, 0
        %1264 = vmatpush.msra.mxu0 0.0
        %1265 = vmatpush.msra.mxu0 0.0
        %1266 = vmatpush.msra.mxu0 0.0
        %1267 = vmatpush.msra.mxu0 0.0
        %1268 = vmatpush.msra.mxu0 0.0
        %1269 = vmatpush.msra.mxu0 0.0
        %1270 = vmatpush.msra.mxu0 0.0
        %1271 = vmatpush.msra.mxu0 0.0
        %1272 = vmatpush.msra.mxu0 0.0
        %1273 = vmatpush.msra.mxu0 0.0
        %1274 = vmatpush.msra.mxu0 0.0
        %1275 = vmatpush.msra.mxu0 0.0
        %1276 = vmatpush.msra.mxu0 %v1252
        %1277 = vmatpush.msra.mxu0 %v1251
        %1278 = vmatpush.msra.mxu0 %v1250
        %1279 = vmatpush.msra.mxu0 %v1249
        %1280 = vmatmul.f32.gmra.mxu0 %v1259
        %v1281 = vpop.f32.mrf.mxu0
        %v1282 = vadd.f32 %v1255, %v1281
        %1283 = vmatmul.f32.gmra.mxu0 %v1262
        %v1284 = vpop.f32.mrf.mxu0
        %v1285 = vadd.f32 %v1255, %v1284
        %1286 = vdwg.mxu0
        %v1287 = vld [vmem:[%s822] sm:$0xff]
        %v1288 = vld [vmem:[%s822 + $0x8] sm:$0xff]
        %v1289 = vld [vmem:[%s822 + $0x10] sm:$0xff]
        %v1290 = vld [vmem:[%s822 + $0x18] sm:$0xff]
        %v1291 = vmul.f32 %v1282, 0.25
        %v1292 = vmul.f32 %v1285, 0.25
        %1294 = vrot.lane.b32.xlu0 %v1282, 96
        %v1295 = vpop.permute.xlu0 %1294
        %vm1296 = vcmask 130048
        %v1298 = vsel %vm1296, %v1291, 0
        %v1300 = vsel %vm1296, %v1295, 0
        %1302 = vmatpush.xpose.msra.mxu0 0.0
        %1303 = vmatpush.xpose.msra.mxu0 0.0
        %1304 = vmatpush.xpose.msra.mxu0 0.0
        %1305 = vmatpush.xpose.msra.mxu0 0.0
        %1306 = vmatpush.xpose.msra.mxu0 0.0
        %1307 = vmatpush.xpose.msra.mxu0 0.0
        %1308 = vmatpush.xpose.msra.mxu0 0.0
        %1309 = vmatpush.xpose.msra.mxu0 0.0
        %1310 = vmatpush.xpose.msra.mxu0 0.0
        %1311 = vmatpush.xpose.msra.mxu0 0.0
        %1312 = vmatpush.xpose.msra.mxu0 0.0
        %1313 = vmatpush.xpose.msra.mxu0 0.0
        %1314 = vmatpush.xpose.msra.mxu0 0.0
        %1315 = vmatpush.xpose.msra.mxu0 0.0
        %1316 = vmatpush.xpose.msra.mxu0 0.0
        %1317 = vmatpush.xpose.msra.mxu0 %v1300
        %1318 = vmatmul.f32.gmra.mxu0 %v1298
        %v1319 = vpop.f32.mrf.mxu0
        %v1320 = vadd.f32 0.0, %v1319
        %1321 = vdwg.mxu0
        %1323 = vrot.lane.b32.xlu0 %v1285, 96
        %v1324 = vpop.permute.xlu0 %1323
        %v1326 = vsel %vm1296, %v1292, 0
        %v1328 = vsel %vm1296, %v1324, 0
        %1330 = vmatpush.xpose.msra.mxu0 0.0
        %1331 = vmatpush.xpose.msra.mxu0 0.0
        %1332 = vmatpush.xpose.msra.mxu0 0.0
        %1333 = vmatpush.xpose.msra.mxu0 0.0
        %1334 = vmatpush.xpose.msra.mxu0 0.0
        %1335 = vmatpush.xpose.msra.mxu0 0.0
        %1336 = vmatpush.xpose.msra.mxu0 0.0
        %1337 = vmatpush.xpose.msra.mxu0 0.0
        %1338 = vmatpush.xpose.msra.mxu0 0.0
        %1339 = vmatpush.xpose.msra.mxu0 0.0
        %1340 = vmatpush.xpose.msra.mxu0 0.0
        %1341 = vmatpush.xpose.msra.mxu0 0.0
        %1342 = vmatpush.xpose.msra.mxu0 0.0
        %1343 = vmatpush.xpose.msra.mxu0 0.0
        %1344 = vmatpush.xpose.msra.mxu0 0.0
        %1345 = vmatpush.xpose.msra.mxu0 %v1328
        %1346 = vmatmul.f32.gmra.mxu0 %v1326
        %v1347 = vpop.f32.mrf.mxu0
        %v1348 = vadd.f32 0.0, %v1347
        %1349 = vdwg.mxu0
        %vm1350 = vcmask 64512
        %v1351 = vsel %vm1350, %v1320, -inf
        %1352 = vmax.xlane.f32.xlu0 %v1351
        %v1353 = vpop.xlane.xlu0 %1352
        %v1354 = vsel %vm1350, %v1348, -inf
        %1355 = vmax.xlane.f32.xlu0 %v1354
        %v1356 = vpop.xlane.xlu0 %1355
        %v1357 = vsub.f32 %v1320, %v1353
        %v1358 = vsub.f32 %v1348, %v1356
        %v1359 = vmul.f32 %v1357, 1.442695
        %v1360 = vpow.pop %v1359
        %v1361 = vmul.f32 %v1358, 1.442695
        %v1362 = vpow.pop %v1361
        %v1363 = vsel %vm1350, %v1360, 0.0
        %1364 = vadd.xlane.f32.xlu0 %v1363
        %v1365 = vpop.xlane.xlu0 %1364
        %v1366 = vsel %vm1350, %v1362, 0.0
        %1367 = vadd.xlane.f32.xlu0 %v1366
        %v1368 = vpop.xlane.xlu0 %1367
        %v1369 = vrcp.pop %v1365
        %v1370 = vmul.f32 %v1365, %v1369
        %v1371 = vsub.f32 1.0, %v1370
        %v1372 = vmul.f32 %v1369, %v1371
        %v1373 = vadd.f32 %v1369, %v1372
        %vm1374 = vweird.f32 %v1365
        %vm1375 = vweird.f32 %v1369
        %vm1376 = vmor %vm1374, %vm1375
        %v1377 = vsel %vm1376, %v1369, %v1373
        %v1378 = vand.u32 2147483647, %v1365
        %vm1379 = vcmp.eq.f32.partialorder %v1378, 8.507059e+37
        %v1380 = vand.u32 %v1365, 2147483648
        %v1381 = vor.u32 1.1754944e-38, %v1380
        %v1382 = vsel %vm1379, %v1381, %v1377
        %v1383 = vmul.f32 %v1360, %v1382
        %v1384 = vrcp.pop %v1368
        %v1385 = vmul.f32 %v1368, %v1384
        %v1386 = vsub.f32 1.0, %v1385
        %v1387 = vmul.f32 %v1384, %v1386
        %v1388 = vadd.f32 %v1384, %v1387
        %vm1389 = vweird.f32 %v1368
        %vm1390 = vweird.f32 %v1384
        %vm1391 = vmor %vm1389, %vm1390
        %v1392 = vsel %vm1391, %v1384, %v1388
        %v1393 = vand.u32 2147483647, %v1368
        %vm1394 = vcmp.eq.f32.partialorder %v1393, 8.507059e+37
        %v1395 = vand.u32 %v1368, 2147483648
        %v1396 = vor.u32 1.1754944e-38, %v1395
        %v1397 = vsel %vm1394, %v1396, %v1392
        %v1398 = vmul.f32 %v1362, %v1397
        %1399 = vrot.lane.b32.xlu0 %v1282, 64
        %v1400 = vpop.permute.xlu0 %1399
        %v1403 = vsel %vm1350, %v1383, 0
        %1405 = vmatpush.msra.mxu0 0.0
        %1406 = vmatpush.msra.mxu0 0.0
        %1407 = vmatpush.msra.mxu0 0.0
        %1408 = vmatpush.msra.mxu0 0.0
        %1409 = vmatpush.msra.mxu0 0.0
        %1410 = vmatpush.msra.mxu0 0.0
        %1411 = vmatpush.msra.mxu0 0.0
        %1412 = vmatpush.msra.mxu0 0.0
        %1413 = vmatpush.msra.mxu0 0.0
        %1414 = vmatpush.msra.mxu0 0.0
        %1415 = vmatpush.msra.mxu0 0.0
        %1416 = vmatpush.msra.mxu0 0.0
        %1417 = vmatpush.msra.mxu0 0.0
        %1418 = vmatpush.msra.mxu0 0.0
        %1419 = vmatpush.msra.mxu0 0.0
        %1420 = vmatpush.msra.mxu0 %v1400
        %1421 = vmatmul.f32.gmra.mxu0 %v1403
        %v1422 = vpop.f32.mrf.mxu0
        %v1423 = vadd.f32 0.0, %v1422
        %1424 = vdwg.mxu0
        %1425 = vrot.lane.b32.xlu0 %v1285, 64
        %v1426 = vpop.permute.xlu0 %1425
        %v1429 = vsel %vm1350, %v1398, 0
        %1431 = vmatpush.msra.mxu0 0.0
        %1432 = vmatpush.msra.mxu0 0.0
        %1433 = vmatpush.msra.mxu0 0.0
        %1434 = vmatpush.msra.mxu0 0.0
        %1435 = vmatpush.msra.mxu0 0.0
        %1436 = vmatpush.msra.mxu0 0.0
        %1437 = vmatpush.msra.mxu0 0.0
        %1438 = vmatpush.msra.mxu0 0.0
        %1439 = vmatpush.msra.mxu0 0.0
        %1440 = vmatpush.msra.mxu0 0.0
        %1441 = vmatpush.msra.mxu0 0.0
        %1442 = vmatpush.msra.mxu0 0.0
        %1443 = vmatpush.msra.mxu0 0.0
        %1444 = vmatpush.msra.mxu0 0.0
        %1445 = vmatpush.msra.mxu0 0.0
        %1446 = vmatpush.msra.mxu0 %v1426
        %1447 = vmatmul.f32.gmra.mxu0 %v1429
        %v1448 = vpop.f32.mrf.mxu0
        %v1449 = vadd.f32 0.0, %v1448
        %1450 = vdwg.mxu0
        %1451 = vrot.lane.b32.xlu0 %v1291, 112
        %v1452 = vpop.permute.xlu0 %1451
        %1453 = vrot.lane.b32.xlu0 %v1282, 80
        %v1454 = vpop.permute.xlu0 %1453
        %v1455 = vsel %vm1296, %v1452, 0
        %v1457 = vsel %vm1296, %v1454, 0
        %1459 = vmatpush.xpose.msra.mxu0 0.0
        %1460 = vmatpush.xpose.msra.mxu0 0.0
        %1461 = vmatpush.xpose.msra.mxu0 0.0
        %1462 = vmatpush.xpose.msra.mxu0 0.0
        %1463 = vmatpush.xpose.msra.mxu0 0.0
        %1464 = vmatpush.xpose.msra.mxu0 0.0
        %1465 = vmatpush.xpose.msra.mxu0 0.0
        %1466 = vmatpush.xpose.msra.mxu0 0.0
        %1467 = vmatpush.xpose.msra.mxu0 0.0
        %1468 = vmatpush.xpose.msra.mxu0 0.0
        %1469 = vmatpush.xpose.msra.mxu0 0.0
        %1470 = vmatpush.xpose.msra.mxu0 0.0
        %1471 = vmatpush.xpose.msra.mxu0 0.0
        %1472 = vmatpush.xpose.msra.mxu0 0.0
        %1473 = vmatpush.xpose.msra.mxu0 0.0
        %1474 = vmatpush.xpose.msra.mxu0 %v1457
        %1475 = vmatmul.f32.gmra.mxu0 %v1455
        %v1476 = vpop.f32.mrf.mxu0
        %v1477 = vadd.f32 0.0, %v1476
        %1478 = vdwg.mxu0
        %1479 = vrot.lane.b32.xlu0 %v1292, 112
        %v1480 = vpop.permute.xlu0 %1479
        %1481 = vrot.lane.b32.xlu0 %v1285, 80
        %v1482 = vpop.permute.xlu0 %1481
        %v1483 = vsel %vm1296, %v1480, 0
        %v1485 = vsel %vm1296, %v1482, 0
        %1487 = vmatpush.xpose.msra.mxu0 0.0
        %1488 = vmatpush.xpose.msra.mxu0 0.0
        %1489 = vmatpush.xpose.msra.mxu0 0.0
        %1490 = vmatpush.xpose.msra.mxu0 0.0
        %1491 = vmatpush.xpose.msra.mxu0 0.0
        %1492 = vmatpush.xpose.msra.mxu0 0.0
        %1493 = vmatpush.xpose.msra.mxu0 0.0
        %1494 = vmatpush.xpose.msra.mxu0 0.0
        %1495 = vmatpush.xpose.msra.mxu0 0.0
        %1496 = vmatpush.xpose.msra.mxu0 0.0
        %1497 = vmatpush.xpose.msra.mxu0 0.0
        %1498 = vmatpush.xpose.msra.mxu0 0.0
        %1499 = vmatpush.xpose.msra.mxu0 0.0
        %1500 = vmatpush.xpose.msra.mxu0 0.0
        %1501 = vmatpush.xpose.msra.mxu0 0.0
        %1502 = vmatpush.xpose.msra.mxu0 %v1485
        %1503 = vmatmul.f32.gmra.mxu0 %v1483
        %v1504 = vpop.f32.mrf.mxu0
        %v1505 = vadd.f32 0.0, %v1504
        %1506 = vdwg.mxu0
        %v1507 = vsel %vm1350, %v1477, -inf
        %1508 = vmax.xlane.f32.xlu0 %v1507
        %v1509 = vpop.xlane.xlu0 %1508
        %v1510 = vsel %vm1350, %v1505, -inf
        %1511 = vmax.xlane.f32.xlu0 %v1510
        %v1512 = vpop.xlane.xlu0 %1511
        %v1513 = vsub.f32 %v1477, %v1509
        %v1514 = vsub.f32 %v1505, %v1512
        %v1515 = vmul.f32 %v1513, 1.442695
        %v1516 = vpow.pop %v1515
        %v1517 = vmul.f32 %v1514, 1.442695
        %v1518 = vpow.pop %v1517
        %v1519 = vsel %vm1350, %v1516, 0.0
        %1520 = vadd.xlane.f32.xlu0 %v1519
        %v1521 = vpop.xlane.xlu0 %1520
        %v1522 = vsel %vm1350, %v1518, 0.0
        %1523 = vadd.xlane.f32.xlu0 %v1522
        %v1524 = vpop.xlane.xlu0 %1523
        %v1525 = vrcp.pop %v1521
        %v1526 = vmul.f32 %v1521, %v1525
        %v1527 = vsub.f32 1.0, %v1526
        %v1528 = vmul.f32 %v1525, %v1527
        %v1529 = vadd.f32 %v1525, %v1528
        %vm1530 = vweird.f32 %v1521
        %vm1531 = vweird.f32 %v1525
        %vm1532 = vmor %vm1530, %vm1531
        %v1533 = vsel %vm1532, %v1525, %v1529
        %v1534 = vand.u32 2147483647, %v1521
        %vm1535 = vcmp.eq.f32.partialorder %v1534, 8.507059e+37
        %v1536 = vand.u32 %v1521, 2147483648
        %v1537 = vor.u32 1.1754944e-38, %v1536
        %v1538 = vsel %vm1535, %v1537, %v1533
        %v1539 = vmul.f32 %v1516, %v1538
        %v1540 = vrcp.pop %v1524
        %v1541 = vmul.f32 %v1524, %v1540
        %v1542 = vsub.f32 1.0, %v1541
        %v1543 = vmul.f32 %v1540, %v1542
        %v1544 = vadd.f32 %v1540, %v1543
        %vm1545 = vweird.f32 %v1524
        %vm1546 = vweird.f32 %v1540
        %vm1547 = vmor %vm1545, %vm1546
        %v1548 = vsel %vm1547, %v1540, %v1544
        %v1549 = vand.u32 2147483647, %v1524
        %vm1550 = vcmp.eq.f32.partialorder %v1549, 8.507059e+37
        %v1551 = vand.u32 %v1524, 2147483648
        %v1552 = vor.u32 1.1754944e-38, %v1551
        %v1553 = vsel %vm1550, %v1552, %v1548
        %v1554 = vmul.f32 %v1518, %v1553
        %1555 = vrot.lane.b32.xlu0 %v1282, 48
        %v1556 = vpop.permute.xlu0 %1555
        %v1559 = vsel %vm1350, %v1539, 0
        %1561 = vmatpush.msra.mxu0 0.0
        %1562 = vmatpush.msra.mxu0 0.0
        %1563 = vmatpush.msra.mxu0 0.0
        %1564 = vmatpush.msra.mxu0 0.0
        %1565 = vmatpush.msra.mxu0 0.0
        %1566 = vmatpush.msra.mxu0 0.0
        %1567 = vmatpush.msra.mxu0 0.0
        %1568 = vmatpush.msra.mxu0 0.0
        %1569 = vmatpush.msra.mxu0 0.0
        %1570 = vmatpush.msra.mxu0 0.0
        %1571 = vmatpush.msra.mxu0 0.0
        %1572 = vmatpush.msra.mxu0 0.0
        %1573 = vmatpush.msra.mxu0 0.0
        %1574 = vmatpush.msra.mxu0 0.0
        %1575 = vmatpush.msra.mxu0 0.0
        %1576 = vmatpush.msra.mxu0 %v1556
        %1577 = vmatmul.f32.gmra.mxu0 %v1559
        %v1578 = vpop.f32.mrf.mxu0
        %v1579 = vadd.f32 0.0, %v1578
        %1580 = vdwg.mxu0
        %1581 = vrot.lane.b32.xlu0 %v1285, 48
        %v1582 = vpop.permute.xlu0 %1581
        %v1585 = vsel %vm1350, %v1554, 0
        %1587 = vmatpush.msra.mxu0 0.0
        %1588 = vmatpush.msra.mxu0 0.0
        %1589 = vmatpush.msra.mxu0 0.0
        %1590 = vmatpush.msra.mxu0 0.0
        %1591 = vmatpush.msra.mxu0 0.0
        %1592 = vmatpush.msra.mxu0 0.0
        %1593 = vmatpush.msra.mxu0 0.0
        %1594 = vmatpush.msra.mxu0 0.0
        %1595 = vmatpush.msra.mxu0 0.0
        %1596 = vmatpush.msra.mxu0 0.0
        %1597 = vmatpush.msra.mxu0 0.0
        %1598 = vmatpush.msra.mxu0 0.0
        %1599 = vmatpush.msra.mxu0 0.0
        %1600 = vmatpush.msra.mxu0 0.0
        %1601 = vmatpush.msra.mxu0 0.0
        %1602 = vmatpush.msra.mxu0 %v1582
        %1603 = vmatmul.f32.gmra.mxu0 %v1585
        %v1604 = vpop.f32.mrf.mxu0
        %v1605 = vadd.f32 0.0, %v1604
        %1606 = vdwg.mxu0
        %v1608 = vsel %vm1296, %v1579, 0
        %v1611 = vsel %vm1296, %v1605, 0
        %1613 = vmatpush.msra.mxu0 0.0
        %1614 = vmatpush.msra.mxu0 0.0
        %1615 = vmatpush.msra.mxu0 0.0
        %1616 = vmatpush.msra.mxu0 0.0
        %1617 = vmatpush.msra.mxu0 0.0
        %1618 = vmatpush.msra.mxu0 0.0
        %1619 = vmatpush.msra.mxu0 0.0
        %1620 = vmatpush.msra.mxu0 0.0
        %1621 = vmatpush.msra.mxu0 0.0
        %1622 = vmatpush.msra.mxu0 0.0
        %1623 = vmatpush.msra.mxu0 0.0
        %1624 = vmatpush.msra.mxu0 0.0
        %1625 = vmatpush.msra.mxu0 0.0
        %1626 = vmatpush.msra.mxu0 0.0
        %1627 = vmatpush.msra.mxu0 %v1290
        %1628 = vmatpush.msra.mxu0 %v1289
        %1629 = vmatmul.f32.gmra.mxu0 %v1608
        %v1630 = vpop.f32.mrf.mxu0
        %v1631 = vadd.f32 0.0, %v1630
        %1632 = vmatmul.f32.gmra.mxu0 %v1611
        %v1633 = vpop.f32.mrf.mxu0
        %v1634 = vadd.f32 0.0, %v1633
        %1635 = vdwg.mxu0
        %v1637 = vsel %vm1296, %v1423, 0
        %v1640 = vsel %vm1296, %v1449, 0
        %1642 = vmatpush.msra.mxu0 0.0
        %1643 = vmatpush.msra.mxu0 0.0
        %1644 = vmatpush.msra.mxu0 0.0
        %1645 = vmatpush.msra.mxu0 0.0
        %1646 = vmatpush.msra.mxu0 0.0
        %1647 = vmatpush.msra.mxu0 0.0
        %1648 = vmatpush.msra.mxu0 0.0
        %1649 = vmatpush.msra.mxu0 0.0
        %1650 = vmatpush.msra.mxu0 0.0
        %1651 = vmatpush.msra.mxu0 0.0
        %1652 = vmatpush.msra.mxu0 0.0
        %1653 = vmatpush.msra.mxu0 0.0
        %1654 = vmatpush.msra.mxu0 0.0
        %1655 = vmatpush.msra.mxu0 0.0
        %1656 = vmatpush.msra.mxu0 %v1288
        %1657 = vmatpush.msra.mxu0 %v1287
        %1658 = vmatmul.f32.gmra.mxu0 %v1637
        %v1659 = vpop.f32.mrf.mxu0
        %v1660 = vadd.f32 %v1631, %v1659
        %1661 = vmatmul.f32.gmra.mxu0 %v1640
        %v1662 = vpop.f32.mrf.mxu0
        %v1663 = vadd.f32 %v1634, %v1662
        %1664 = vdwg.mxu0
        %1665 = vst.msk [vmem:[%s980] sm:$0xff] %vm1350, %v1383
        %1666 = vst.msk [vmem:[%s980 + $0x8] sm:$0xff] %vm1350, %v1539
        %1667 = vst.msk [vmem:[%s980 + $0x10] sm:$0xff] %vm1350, %v1398
        %1668 = vst.msk [vmem:[%s980 + $0x18] sm:$0xff] %vm1350, %v1554
        %v1669 = vld [vmem:[%s947] sm:$0x1]
        %v1671 = vperm.slane %v1669, 0
        %v1673 = vadd.f32 %v1660, %v1671
        %v1674 = vadd.f32 %v1663, %v1671
        %v1675 = vadd.f32 %v1673, %v1247
        %v1676 = vadd.f32 %v1674, %v1248
        %v1677 = vld [vmem:[%s950] sm:$0x1]
        %v1678 = vld [vmem:[%s953] sm:$0x1]
        %v1679 = vsel %vm1257, %v1675, 0.0
        %1680 = vadd.xlane.f32.xlu0 %v1679
        %v1681 = vpop.xlane.xlu0 %1680
        %v1682 = vsel %vm1257, %v1676, 0.0
        %1683 = vadd.xlane.f32.xlu0 %v1682
        %v1684 = vpop.xlane.xlu0 %1683
        %v1685 = vrcp.pop 32.0
        %v1686 = vmul.f32 32.0, %v1685
        %v1687 = vsub.f32 1.0, %v1686
        %v1688 = vmul.f32 %v1685, %v1687
        %v1689 = vadd.f32 %v1685, %v1688
        %vm1690 = vweird.f32 %v1685
        %v1691 = vsel %vm1690, %v1685, %v1689
        %v1692 = vmul.f32 %v1681, %v1691
        %v1693 = vmul.f32 %v1684, %v1691
        %v1694 = vsub.f32 %v1675, %v1692
        %v1695 = vsub.f32 %v1676, %v1693
        %v1696 = vmul.f32 %v1694, %v1694
        %v1697 = vmul.f32 %v1695, %v1695
        %v1698 = vsel %vm1257, %v1696, 0.0
        %1699 = vadd.xlane.f32.xlu0 %v1698
        %v1700 = vpop.xlane.xlu0 %1699
        %v1701 = vsel %vm1257, %v1697, 0.0
        %1702 = vadd.xlane.f32.xlu0 %v1701
        %v1703 = vpop.xlane.xlu0 %1702
        %v1704 = vmul.f32 %v1700, %v1691
        %v1705 = vmul.f32 %v1703, %v1691
        %v1706 = vadd.f32 %v1704, 1e-12
        %v1707 = vadd.f32 %v1705, 1e-12
        %v1708 = vrsqrt.pop %v1706
        %v1709 = vmul.f32 %v1708, %v1706
        %v1710 = vmul.f32 %v1709, %v1708
        %v1711 = vmul.f32 0.5, %v1710
        %v1712 = vsub.f32 1.5, %v1711
        %v1713 = vmul.f32 %v1708, %v1712
        %vm1714 = vweird.f32 %v1706
        %vm1715 = vweird.f32 %v1708
        %vm1716 = vmor %vm1714, %vm1715
        %v1717 = vsel %vm1716, %v1708, %v1713
        %v1718 = vrsqrt.pop %v1707
        %v1719 = vmul.f32 %v1718, %v1707
        %v1720 = vmul.f32 %v1719, %v1718
        %v1721 = vmul.f32 0.5, %v1720
        %v1722 = vsub.f32 1.5, %v1721
        %v1723 = vmul.f32 %v1718, %v1722
        %vm1724 = vweird.f32 %v1707
        %vm1725 = vweird.f32 %v1718
        %vm1726 = vmor %vm1724, %vm1725
        %v1727 = vsel %vm1726, %v1718, %v1723
        %v1728 = vmul.f32 %v1694, %v1717
        %v1729 = vmul.f32 %v1695, %v1727
        %v1731 = vperm.slane %v1677, 0
        %v1733 = vmul.f32 %v1728, %v1731
        %v1734 = vmul.f32 %v1729, %v1731
        %v1736 = vperm.slane %v1678, 0
        %v1738 = vadd.f32 %v1733, %v1736
        %v1739 = vadd.f32 %v1734, %v1736
        %v1740 = vld [vmem:[%s832] sm:$0xff]
        %v1741 = vld [vmem:[%s832 + $0x8] sm:$0xff]
        %v1742 = vld [vmem:[%s832 + $0x10] sm:$0xff]
        %v1743 = vld [vmem:[%s832 + $0x18] sm:$0xff]
        %v1744 = vld [vmem:[%s956] sm:$0x1]
        %v1746 = vperm.slane %v1744, 0
        %v1749 = vsel %vm1257, %v1738, 0
        %v1752 = vsel %vm1257, %v1739, 0
        %1754 = vmatpush.msra.mxu0 0.0
        %1755 = vmatpush.msra.mxu0 0.0
        %1756 = vmatpush.msra.mxu0 0.0
        %1757 = vmatpush.msra.mxu0 0.0
        %1758 = vmatpush.msra.mxu0 0.0
        %1759 = vmatpush.msra.mxu0 0.0
        %1760 = vmatpush.msra.mxu0 0.0
        %1761 = vmatpush.msra.mxu0 0.0
        %1762 = vmatpush.msra.mxu0 0.0
        %1763 = vmatpush.msra.mxu0 0.0
        %1764 = vmatpush.msra.mxu0 0.0
        %1765 = vmatpush.msra.mxu0 0.0
        %1766 = vmatpush.msra.mxu0 %v1743
        %1767 = vmatpush.msra.mxu0 %v1742
        %1768 = vmatpush.msra.mxu0 %v1741
        %1769 = vmatpush.msra.mxu0 %v1740
        %1770 = vmatmul.f32.gmra.mxu0 %v1749
        %v1771 = vpop.f32.mrf.mxu0
        %v1772 = vadd.f32 %v1746, %v1771
        %1773 = vmatmul.f32.gmra.mxu0 %v1752
        %v1774 = vpop.f32.mrf.mxu0
        %v1775 = vadd.f32 %v1746, %v1774
        %1776 = vdwg.mxu0
        %v1777 = vmul.f32 %v1772, 0.5
        %v1778 = vmul.f32 %v1775, 0.5
        %v1779 = vmul.f32 %v1772, 0.044715
        %v1780 = vmul.f32 %v1775, 0.044715
        %v1781 = vmul.f32 %v1779, %v1772
        %v1782 = vmul.f32 %v1780, %v1775
        %v1783 = vmul.f32 %v1781, %v1772
        %v1784 = vmul.f32 %v1782, %v1775
        %v1785 = vadd.f32 %v1772, %v1783
        %v1786 = vadd.f32 %v1775, %v1784
        %v1787 = vmul.f32 %v1785, 0.7978846
        %v1788 = vmul.f32 %v1786, 0.7978846
        %v1789 = vtanh.pop %v1787
        %v1790 = vtanh.pop %v1788
        %v1791 = vadd.f32 %v1789, 1.0
        %v1792 = vadd.f32 %v1790, 1.0
        %v1793 = vmul.f32 %v1777, %v1791
        %v1794 = vmul.f32 %v1778, %v1792
        %v1795 = vld [vmem:[%s961] sm:$0xff]
        %v1796 = vld [vmem:[%s961 + $0x8] sm:$0xff]
        %v1797 = vld [vmem:[%s961 + $0x10] sm:$0xff]
        %v1798 = vld [vmem:[%s961 + $0x18] sm:$0xff]
        %v1799 = vld [vmem:[%s961 + $0x20] sm:$0xff]
        %v1800 = vld [vmem:[%s961 + $0x28] sm:$0xff]
        %v1801 = vld [vmem:[%s961 + $0x30] sm:$0xff]
        %v1802 = vld [vmem:[%s961 + $0x38] sm:$0xff]
        %v1803 = vld [vmem:[%s964] sm:$0x1]
        %v1805 = vperm.slane %v1803, 0
        %vm1807 = vcmask 523264
        %v1809 = vsel %vm1807, %v1793, 0
        %v1812 = vsel %vm1807, %v1794, 0
        %1814 = vmatpush.msra.mxu0 0.0
        %1815 = vmatpush.msra.mxu0 0.0
        %1816 = vmatpush.msra.mxu0 0.0
        %1817 = vmatpush.msra.mxu0 0.0
        %1818 = vmatpush.msra.mxu0 0.0
        %1819 = vmatpush.msra.mxu0 0.0
        %1820 = vmatpush.msra.mxu0 0.0
        %1821 = vmatpush.msra.mxu0 0.0
        %1822 = vmatpush.msra.mxu0 %v1802
        %1823 = vmatpush.msra.mxu0 %v1801
        %1824 = vmatpush.msra.mxu0 %v1800
        %1825 = vmatpush.msra.mxu0 %v1799
        %1826 = vmatpush.msra.mxu0 %v1798
        %1827 = vmatpush.msra.mxu0 %v1797
        %1828 = vmatpush.msra.mxu0 %v1796
        %1829 = vmatpush.msra.mxu0 %v1795
        %1830 = vmatmul.f32.gmra.mxu0 %v1809
        %v1831 = vpop.f32.mrf.mxu0
        %v1832 = vadd.f32 %v1805, %v1831
        %1833 = vmatmul.f32.gmra.mxu0 %v1812
        %v1834 = vpop.f32.mrf.mxu0
        %v1835 = vadd.f32 %v1805, %v1834
        %1836 = vdwg.mxu0
        %v1837 = vadd.f32 %v1832, %v1738
        %v1838 = vadd.f32 %v1835, %v1739
        %v1839 = vld [vmem:[%s967] sm:$0x1]
        %v1840 = vld [vmem:[%s970] sm:$0x1]
        %v1841 = vsel %vm1257, %v1837, 0.0
        %1842 = vadd.xlane.f32.xlu0 %v1841
        %v1843 = vpop.xlane.xlu0 %1842
        %v1844 = vsel %vm1257, %v1838, 0.0
        %1845 = vadd.xlane.f32.xlu0 %v1844
        %v1846 = vpop.xlane.xlu0 %1845
        %v1847 = vmul.f32 %v1843, %v1691
        %v1848 = vmul.f32 %v1846, %v1691
        %v1849 = vsub.f32 %v1837, %v1847
        %v1850 = vsub.f32 %v1838, %v1848
        %v1851 = vmul.f32 %v1849, %v1849
        %v1852 = vmul.f32 %v1850, %v1850
        %v1853 = vsel %vm1257, %v1851, 0.0
        %1854 = vadd.xlane.f32.xlu0 %v1853
        %v1855 = vpop.xlane.xlu0 %1854
        %v1856 = vsel %vm1257, %v1852, 0.0
        %1857 = vadd.xlane.f32.xlu0 %v1856
        %v1858 = vpop.xlane.xlu0 %1857
        %v1859 = vmul.f32 %v1855, %v1691
        %v1860 = vmul.f32 %v1858, %v1691
        %v1861 = vadd.f32 %v1859, 1e-12
        %v1862 = vadd.f32 %v1860, 1e-12
        %v1863 = vrsqrt.pop %v1861
        %v1864 = vmul.f32 %v1863, %v1861
        %v1865 = vmul.f32 %v1864, %v1863
        %v1866 = vmul.f32 0.5, %v1865
        %v1867 = vsub.f32 1.5, %v1866
        %v1868 = vmul.f32 %v1863, %v1867
        %vm1869 = vweird.f32 %v1861
        %vm1870 = vweird.f32 %v1863
        %vm1871 = vmor %vm1869, %vm1870
        %v1872 = vsel %vm1871, %v1863, %v1868
        %v1873 = vrsqrt.pop %v1862
        %v1874 = vmul.f32 %v1873, %v1862
        %v1875 = vmul.f32 %v1874, %v1873
        %v1876 = vmul.f32 0.5, %v1875
        %v1877 = vsub.f32 1.5, %v1876
        %v1878 = vmul.f32 %v1873, %v1877
        %vm1879 = vweird.f32 %v1862
        %vm1880 = vweird.f32 %v1873
        %vm1881 = vmor %vm1879, %vm1880
        %v1882 = vsel %vm1881, %v1873, %v1878
        %v1883 = vmul.f32 %v1849, %v1872
        %v1884 = vmul.f32 %v1850, %v1882
        %v1886 = vperm.slane %v1839, 0
        %v1888 = vmul.f32 %v1883, %v1886
        %v1889 = vmul.f32 %v1884, %v1886
        %v1891 = vperm.slane %v1840, 0
        %v1893 = vadd.f32 %v1888, %v1891
        %v1894 = vadd.f32 %v1889, %v1891
        %1895 = vst.msk [vmem:[#allocation2] sm:$0xff] %vm1257, %v1893
        %1896 = vst.msk [vmem:[#allocation2 + $0x8] sm:$0xff] %vm1257, %v1894
        %v1897 = vld [vmem:[%s19] sm:$0xff]
        %v1898 = vld [vmem:[%s19 + $0x8] sm:$0xff]
        %v1899 = vld [vmem:[%s19 + $0x10] sm:$0xff]
        %v1900 = vld [vmem:[%s19 + $0x18] sm:$0xff]
        %v1901 = vld [vmem:[%s19 + $0x20] sm:$0xff]
        %v1902 = vld [vmem:[%s19 + $0x28] sm:$0xff]
        %v1903 = vld [vmem:[%s19 + $0x30] sm:$0xff]
        %v1904 = vld [vmem:[%s19 + $0x38] sm:$0xff]
        %v1905 = vld [vmem:[%s19 + $0x40] sm:$0xff]
        %v1906 = vld [vmem:[%s19 + $0x48] sm:$0xff]
        %v1907 = vld [vmem:[%s19 + $0x50] sm:$0xff]
        %v1908 = vld [vmem:[%s19 + $0x58] sm:$0xff]
        %v1909 = vld [vmem:[%s19 + $0x60] sm:$0xff]
        %v1910 = vld [vmem:[%s19 + $0x68] sm:$0xff]
        %v1911 = vld [vmem:[%s19 + $0x70] sm:$0xff]
        %v1912 = vld [vmem:[%s19 + $0x78] sm:$0xff]
        %v1913 = vld [vmem:[%s19 + $0x80] sm:$0xff]
        %v1914 = vld [vmem:[%s19 + $0x88] sm:$0xff]
        %v1915 = vld [vmem:[%s19 + $0x90] sm:$0xff]
        %v1916 = vld [vmem:[%s19 + $0x98] sm:$0xff]
        %v1917 = vld [vmem:[%s19 + $0xa0] sm:$0xff]
        %v1918 = vld [vmem:[%s19 + $0xa8] sm:$0xff]
        %v1919 = vld [vmem:[%s19 + $0xb0] sm:$0xff]
        %v1920 = vld [vmem:[%s19 + $0xb8] sm:$0xff]
        %v1921 = vld [vmem:[%s20] sm:$0x3f]
        %v1923 = vperm.slane %v1921, 0
        %v1924 = vperm.slane %v1921, 1
        %v1925 = vperm.slane %v1921, 2
        %v1926 = vperm.slane %v1921, 3
        %v1927 = vperm.slane %v1921, 4
        %v1928 = vperm.slane %v1921, 5
        %v1936 = vsel %vm1257, %v1893, 0
        %v1939 = vsel %vm1257, %v1894, 0
        %1941 = vmatpush.msra.mxu0 0.0
        %1942 = vmatpush.msra.mxu0 0.0
        %1943 = vmatpush.msra.mxu0 0.0
        %1944 = vmatpush.msra.mxu0 0.0
        %1945 = vmatpush.msra.mxu0 0.0
        %1946 = vmatpush.msra.mxu0 0.0
        %1947 = vmatpush.msra.mxu0 0.0
        %1948 = vmatpush.msra.mxu0 0.0
        %1949 = vmatpush.msra.mxu0 0.0
        %1950 = vmatpush.msra.mxu0 0.0
        %1951 = vmatpush.msra.mxu0 0.0
        %1952 = vmatpush.msra.mxu0 0.0
        %1953 = vmatpush.msra.mxu0 %v1915
        %1954 = vmatpush.msra.mxu0 %v1909
        %1955 = vmatpush.msra.mxu0 %v1903
        %1956 = vmatpush.msra.mxu0 %v1897
        %1957 = vmatmul.f32.gmra.mxu0 %v1936
        %v1958 = vpop.f32.mrf.mxu0
        %v1959 = vadd.f32 %v1923, %v1958
        %1960 = vmatmul.f32.gmra.mxu0 %v1939
        %v1961 = vpop.f32.mrf.mxu0
        %v1962 = vadd.f32 %v1923, %v1961
        %1963 = vdwg.mxu0
        %1964 = vmatpush.msra.mxu0 0.0
        %1965 = vmatpush.msra.mxu0 0.0
        %1966 = vmatpush.msra.mxu0 0.0
        %1967 = vmatpush.msra.mxu0 0.0
        %1968 = vmatpush.msra.mxu0 0.0
        %1969 = vmatpush.msra.mxu0 0.0
        %1970 = vmatpush.msra.mxu0 0.0
        %1971 = vmatpush.msra.mxu0 0.0
        %1972 = vmatpush.msra.mxu0 0.0
        %1973 = vmatpush.msra.mxu0 0.0
        %1974 = vmatpush.msra.mxu0 0.0
        %1975 = vmatpush.msra.mxu0 0.0
        %1976 = vmatpush.msra.mxu0 %v1916
        %1977 = vmatpush.msra.mxu0 %v1910
        %1978 = vmatpush.msra.mxu0 %v1904
        %1979 = vmatpush.msra.mxu0 %v1898
        %1980 = vmatmul.f32.gmra.mxu0 %v1936
        %v1981 = vpop.f32.mrf.mxu0
        %v1982 = vadd.f32 %v1924, %v1981
        %1983 = vmatmul.f32.gmra.mxu0 %v1939
        %v1984 = vpop.f32.mrf.mxu0
        %v1985 = vadd.f32 %v1924, %v1984
        %1986 = vdwg.mxu0
        %1987 = vmatpush.msra.mxu0 0.0
        %1988 = vmatpush.msra.mxu0 0.0
        %1989 = vmatpush.msra.mxu0 0.0
        %1990 = vmatpush.msra.mxu0 0.0
        %1991 = vmatpush.msra.mxu0 0.0
        %1992 = vmatpush.msra.mxu0 0.0
        %1993 = vmatpush.msra.mxu0 0.0
        %1994 = vmatpush.msra.mxu0 0.0
        %1995 = vmatpush.msra.mxu0 0.0
        %1996 = vmatpush.msra.mxu0 0.0
        %1997 = vmatpush.msra.mxu0 0.0
        %1998 = vmatpush.msra.mxu0 0.0
        %1999 = vmatpush.msra.mxu0 %v1917
        %2000 = vmatpush.msra.mxu0 %v1911
        %2001 = vmatpush.msra.mxu0 %v1905
        %2002 = vmatpush.msra.mxu0 %v1899
        %2003 = vmatmul.f32.gmra.mxu0 %v1936
        %v2004 = vpop.f32.mrf.mxu0
        %v2005 = vadd.f32 %v1925, %v2004
        %2006 = vmatmul.f32.gmra.mxu0 %v1939
        %v2007 = vpop.f32.mrf.mxu0
        %v2008 = vadd.f32 %v1925, %v2007
        %2009 = vdwg.mxu0
        %2010 = vmatpush.msra.mxu0 0.0
        %2011 = vmatpush.msra.mxu0 0.0
        %2012 = vmatpush.msra.mxu0 0.0
        %2013 = vmatpush.msra.mxu0 0.0
        %2014 = vmatpush.msra.mxu0 0.0
        %2015 = vmatpush.msra.mxu0 0.0
        %2016 = vmatpush.msra.mxu0 0.0
        %2017 = vmatpush.msra.mxu0 0.0
        %2018 = vmatpush.msra.mxu0 0.0
        %2019 = vmatpush.msra.mxu0 0.0
        %2020 = vmatpush.msra.mxu0 0.0
        %2021 = vmatpush.msra.mxu0 0.0
        %2022 = vmatpush.msra.mxu0 %v1918
        %2023 = vmatpush.msra.mxu0 %v1912
        %2024 = vmatpush.msra.mxu0 %v1906
        %2025 = vmatpush.msra.mxu0 %v1900
        %2026 = vmatmul.f32.gmra.mxu0 %v1936
        %v2027 = vpop.f32.mrf.mxu0
        %v2028 = vadd.f32 %v1926, %v2027
        %2029 = vmatmul.f32.gmra.mxu0 %v1939
        %v2030 = vpop.f32.mrf.mxu0
        %v2031 = vadd.f32 %v1926, %v2030
        %2032 = vdwg.mxu0
        %2033 = vmatpush.msra.mxu0 0.0
        %2034 = vmatpush.msra.mxu0 0.0
        %2035 = vmatpush.msra.mxu0 0.0
        %2036 = vmatpush.msra.mxu0 0.0
        %2037 = vmatpush.msra.mxu0 0.0
        %2038 = vmatpush.msra.mxu0 0.0
        %2039 = vmatpush.msra.mxu0 0.0
        %2040 = vmatpush.msra.mxu0 0.0
        %2041 = vmatpush.msra.mxu0 0.0
        %2042 = vmatpush.msra.mxu0 0.0
        %2043 = vmatpush.msra.mxu0 0.0
        %2044 = vmatpush.msra.mxu0 0.0
        %2045 = vmatpush.msra.mxu0 %v1919
        %2046 = vmatpush.msra.mxu0 %v1913
        %2047 = vmatpush.msra.mxu0 %v1907
        %2048 = vmatpush.msra.mxu0 %v1901
        %2049 = vmatmul.f32.gmra.mxu0 %v1936
        %v2050 = vpop.f32.mrf.mxu0
        %v2051 = vadd.f32 %v1927, %v2050
        %2052 = vmatmul.f32.gmra.mxu0 %v1939
        %v2053 = vpop.f32.mrf.mxu0
        %v2054 = vadd.f32 %v1927, %v2053
        %2055 = vdwg.mxu0
        %2056 = vmatpush.msra.mxu0 0.0
        %2057 = vmatpush.msra.mxu0 0.0
        %2058 = vmatpush.msra.mxu0 0.0
        %2059 = vmatpush.msra.mxu0 0.0
        %2060 = vmatpush.msra.mxu0 0.0
        %2061 = vmatpush.msra.mxu0 0.0
        %2062 = vmatpush.msra.mxu0 0.0
        %2063 = vmatpush.msra.mxu0 0.0
        %2064 = vmatpush.msra.mxu0 0.0
        %2065 = vmatpush.msra.mxu0 0.0
        %2066 = vmatpush.msra.mxu0 0.0
        %2067 = vmatpush.msra.mxu0 0.0
        %2068 = vmatpush.msra.mxu0 %v1920
        %2069 = vmatpush.msra.mxu0 %v1914
        %2070 = vmatpush.msra.mxu0 %v1908
        %2071 = vmatpush.msra.mxu0 %v1902
        %2072 = vmatmul.f32.gmra.mxu0 %v1936
        %v2073 = vpop.f32.mrf.mxu0
        %v2074 = vadd.f32 %v1928, %v2073
        %2075 = vmatmul.f32.gmra.mxu0 %v1939
        %v2076 = vpop.f32.mrf.mxu0
        %v2077 = vadd.f32 %v1928, %v2076
        %2078 = vdwg.mxu0
        %2079 = vst [vmem:[%s975] sm:$0xff] %v1959
        %2080 = vst [vmem:[%s975 + $0x8] sm:$0xff] %v1982
        %2081 = vst [vmem:[%s975 + $0x10] sm:$0xff] %v2005
        %2082 = vst [vmem:[%s975 + $0x18] sm:$0xff] %v2028
        %2083 = vst [vmem:[%s975 + $0x20] sm:$0xff] %v2051
        %2084 = vst [vmem:[%s975 + $0x28] sm:$0xff] %v2074
        %2085 = vst [vmem:[%s975 + $0x30] sm:$0xff] %v1962
        %2086 = vst [vmem:[%s975 + $0x38] sm:$0xff] %v1985
        %2087 = vst [vmem:[%s975 + $0x40] sm:$0xff] %v2008
        %2088 = vst [vmem:[%s975 + $0x48] sm:$0xff] %v2031
        %2089 = vst [vmem:[%s975 + $0x50] sm:$0xff] %v2054
        %2090 = vst [vmem:[%s975 + $0x58] sm:$0xff] %v2077
        %p2091 = scmp.eq.s32.totalorder %s43, 1
        // Predicated region
        $region121: #{tinybert_forward.1} parent=103 // pred_check
          %p2092 = pneg %p2091
        $region122: #{tinybert_forward.1} parent=103 // pred_check_branch
          %2094 = sbr.rel (%p2092) target = $region124
        $region123: #{tinybert_forward.1} parent=103 // pred_region
          %v2095 = vld [vmem:[%s15] sm:$0xff]
          %v2096 = vld [vmem:[%s15 + $0x8] sm:$0xff]
          %v2097 = vld [vmem:[%s15 + $0x10] sm:$0xff]
          %v2098 = vld [vmem:[%s15 + $0x18] sm:$0xff]
          %v2099 = vld [vmem:[%s16] sm:$0x1]
          %v2101 = vperm.slane %v2099, 0
          %2103 = vmatpush.msra.mxu0 0.0
          %2104 = vmatpush.msra.mxu0 0.0
          %2105 = vmatpush.msra.mxu0 0.0
          %2106 = vmatpush.msra.mxu0 0.0
          %2107 = vmatpush.msra.mxu0 0.0
          %2108 = vmatpush.msra.mxu0 0.0
          %2109 = vmatpush.msra.mxu0 0.0
          %2110 = vmatpush.msra.mxu0 0.0
          %2111 = vmatpush.msra.mxu0 0.0
          %2112 = vmatpush.msra.mxu0 0.0
          %2113 = vmatpush.msra.mxu0 0.0
          %2114 = vmatpush.msra.mxu0 0.0
          %2115 = vmatpush.msra.mxu0 %v2098
          %2116 = vmatpush.msra.mxu0 %v2097
          %2117 = vmatpush.msra.mxu0 %v2096
          %2118 = vmatpush.msra.mxu0 %v2095
          %2119 = vmatmul.f32.gmra.mxu0 %v1936
          %v2120 = vpop.f32.mrf.mxu0
          %v2121 = vadd.f32 %v2101, %v2120
          %2122 = vmatmul.f32.gmra.mxu0 %v1939
          %v2123 = vpop.f32.mrf.mxu0
          %v2124 = vadd.f32 %v2101, %v2123
          %2125 = vdwg.mxu0
          %vm2126 = vcmask 23552
          %2127 = vst.msk [vmem:[%s21] sm:$0xff] %vm2126, %v2121
          %2128 = vst.msk [vmem:[%s21 + $0x8] sm:$0xff] %vm2126, %v2124
        $region124: #{tinybert_forward.1} parent=103 // pred_fallthru
          _
        %p2129 = scmp.lt.s32.totalorder %s43, 1
        %s2130 = scalar_select %p2129, %s43, 1
        %s2131 = smul.addr %s2130, 12
        %s2132 = smul.addr %s2131, 8
        %s2133 = scalar_lea.vmem %s23, %s2132
        %p2134 = scmp.lt.s32.totalorder %s43, 1
        %s2135 = scalar_select %p2134, %s43, 1
        %s2136 = smul.addr %s2135, 4
        %s2137 = smul.addr %s2136, 8
        %s2138 = scalar_lea.vmem %s24, %s2137
        // Predicated region
        $region125: #{tinybert_forward.1} parent=103 // pred_check
          %p2139 = pneg %p557
        $region126: #{tinybert_forward.1} parent=103 // pred_check_branch
          %2141 = sbr.rel (%p2139) target = $region128
        $region127: #{tinybert_forward.1} parent=103 // pred_region
          _
        $region128: #{tinybert_forward.1} parent=103 // pred_fallthru
          _
        // Predicated region
        $region129: #{tinybert_forward.1} parent=103 // pred_check
          %p2142 = pneg %p578
        $region130: #{tinybert_forward.1} parent=103 // pred_check_branch
          %2144 = sbr.rel (%p2142) target = $region132
        $region131: #{tinybert_forward.1} parent=103 // pred_region
          %2146 = vsyncadd [#allocation5], 0
          %s2147 = sshll.u32 [#allocation9], 4
          %s2148 = int_to_ptr.vmem [resolvable:$true] %s2147
          %s2149 = sshll.u32 %s22, 4
          %s2150 = int_to_ptr.hbm [resolvable:$true] %s2149
          %2155 = dma.vmem_to_hbm [thread:$0]  %s2148, 1536, %s2150, [#allocation5], 768, 768, 48
        $region132: #{tinybert_forward.1} parent=103 // pred_fallthru
          _
        // Predicated region
        $region133: #{tinybert_forward.1} parent=103 // pred_check
          %p2156 = pneg %p604
        $region134: #{tinybert_forward.1} parent=103 // pred_check_branch
          %2158 = sbr.rel (%p2156) target = $region136
        $region135: #{tinybert_forward.1} parent=103 // pred_region
          _
        $region136: #{tinybert_forward.1} parent=103 // pred_fallthru
          _
        // Predicated region
        $region137: #{tinybert_forward.1} parent=103 // pred_check
          %p2159 = pneg %p630
        $region138: #{tinybert_forward.1} parent=103 // pred_check_branch
          %2161 = sbr.rel (%p2159) target = $region140
        $region139: #{tinybert_forward.1} parent=103 // pred_region
          _
        $region140: #{tinybert_forward.1} parent=103 // pred_fallthru
          _
        // Predicated region
        $region141: #{tinybert_forward.1} parent=103 // pred_check
          %p2162 = pneg %p557
        $region142: #{tinybert_forward.1} parent=103 // pred_check_branch
          %2164 = sbr.rel (%p2162) target = $region144
        $region143: #{tinybert_forward.1} parent=103 // pred_region
          _
        $region144: #{tinybert_forward.1} parent=103 // pred_fallthru
          _
        // Predicated region
        $region145: #{tinybert_forward.1} parent=103 // pred_check
          %p2165 = pneg %p578
        $region146: #{tinybert_forward.1} parent=103 // pred_check_branch
          %2167 = sbr.rel (%p2165) target = $region148
        $region147: #{tinybert_forward.1} parent=103 // pred_region
          %2169 = dma.done [#allocation5], 1536
        $region148: #{tinybert_forward.1} parent=103 // pred_fallthru
          _
      $region104: #{tinybert_forward.1} parent=5 // pred_fallthru
        _
      %p2170 = scmp.le.s32.totalorder 2, %s38
      // Predicated region
      $region149: #{tinybert_forward.1} parent=5 // pred_check
        %p2171 = pneg %p2170
      $region150: #{tinybert_forward.1} parent=5 // pred_check_branch
        %2173 = sbr.rel (%p2171) target = $region152
      $region151: #{tinybert_forward.1} parent=5 // pred_region
        %s2174 = ssub.s32 %s38, 2
        // Predicated region
        $region153: #{tinybert_forward.1} parent=151 // pred_check
          %p2175 = pneg %p610
        $region154: #{tinybert_forward.1} parent=151 // pred_check_branch
          %2177 = sbr.rel (%p2175) target = $region156
        $region155: #{tinybert_forward.1} parent=151 // pred_region
          %p2178 = scmp.lt.s32.totalorder %s44, 1
          %s2179 = scalar_select %p2178, %s44, 1
          %s2180 = smul.addr %s2179, 12
          %s2181 = smul.addr %s2180, 8
          %s2182 = scalar_lea.vmem %s23, %s2181
        $region156: #{tinybert_forward.1} parent=151 // pred_fallthru
          _
        // Predicated region
        $region157: #{tinybert_forward.1} parent=151 // pred_check
          %p2183 = pneg %p636
        $region158: #{tinybert_forward.1} parent=151 // pred_check_branch
          %2185 = sbr.rel (%p2183) target = $region160
        $region159: #{tinybert_forward.1} parent=151 // pred_region
          %p2186 = scmp.lt.s32.totalorder %s44, 1
          %s2187 = scalar_select %p2186, %s44, 1
          %s2188 = smul.addr %s2187, 4
          %s2189 = smul.addr %s2188, 8
          %s2190 = scalar_lea.vmem %s24, %s2189
        $region160: #{tinybert_forward.1} parent=151 // pred_fallthru
          _
      $region152: #{tinybert_forward.1} parent=5 // pred_fallthru
        _
    $region6: #{tinybert_forward.1} parent=1 // loop_footer
      %s42 = sadd.s32 1, %s38
    $region7: #{tinybert_forward.1} parent=1 // loop_footer_branch
      %37 = sbr.rel target = $region3
    $region8: #{tinybert_forward.1} parent=1 // loop_exit
      _
    %2191 = vsyncpa [#allocation4], 1
    %s2192 = scalar_lea.sflag [#allocation4], 1
    %2193 = vsyncpa %s2192, 1
    %2194 = vsyncpa [#allocation7], 1
    %s2195 = scalar_lea.sflag [#allocation7], 1
    %2196 = vsyncpa %s2195, 1
    %2197 = vsyncpa [#allocation5], 1
    %s2198 = scalar_lea.sflag [#allocation5], 1
    %2199 = vsyncpa %s2198, 1

</llo_original>
